<compile_context>
chip_gen: v7x
topology: tpu7x:2x2x1
jax: 0.10.0
libtpu: 0.0.40
codegen_flags: <defaults>
</compile_context>

<pallas_src>
import jax
import jax.numpy as jnp
from jax.experimental import pallas as pl
from jax.experimental.pallas import tpu as pltpu


# ------------------------------- kernel ---------------------------------------

def wff_kernel(x_ref, w1_ref, w2_ref, dm_ref, ff_ref, o_ref,
               acc_ref, xs_ref, xe1_ref, he2_ref):
    # x_ref:  (tile_n, d_model)   input token tile (grid-invariant over j)
    # w1_ref: (d_model, tile_ff)  shared W1^T block (bf16)
    # w2_ref: (tile_ff, d_model)  shared W2^T block (bf16)
    # dm_ref: (5, d_model) f32    rows = [s1, e1, r2, d2, b2]   (grid-invariant)
    # ff_ref: (5, tile_ff) f32    rows = [r1, d1, b1, s2, e2]   (varies with j)
    j = pl.program_id(1)

    @pl.when(j == 0)
    def _init():
        x = x_ref[...].astype(jnp.float32)
        s1 = dm_ref[0:1, :]
        e1 = dm_ref[1:2, :]
        acc_ref[...] = jnp.zeros_like(acc_ref)
        he2_ref[...] = jnp.zeros_like(he2_ref)
        # rank-1 input projection x . e1 (independent of the ff tile)
        xe1_ref[...] = jnp.sum(x * e1, axis=-1, keepdims=True)
        # pre-scaled bf16 MXU operand, reused for every ff step of this token tile
        xs_ref[...] = (x * s1).astype(jnp.bfloat16)

    r1 = ff_ref[0:1, :]
    d1 = ff_ref[1:2, :]
    b1 = ff_ref[2:3, :]
    s2 = ff_ref[3:4, :]
    e2 = ff_ref[4:5, :]

    # ---- layer 1 on this ff tile: bf16 operands, f32 accumulation on the MXU.
    h = jnp.dot(xs_ref[...], w1_ref[...], preferred_element_type=jnp.float32)
    h = h * r1 + xe1_ref[...] * d1 + b1
    h = jnp.maximum(h, 0.0)                                  # ReLU
    # TODO(synk): nn.Dropout(0.1) is identity in eval mode; training-mode stochastic
    # dropout (pltpu.prng_seed / prng_random_bits) is not implemented here.

    # ---- layer 2 partial sums over the ff (reduction) axis.
    h_s = (h * s2).astype(jnp.bfloat16)
    acc_ref[...] += jnp.dot(h_s, w2_ref[...], preferred_element_type=jnp.float32)
    he2_ref[...] += jnp.sum(h * e2, axis=-1, keepdims=True)

    @pl.when(j == pl.num_programs(1) - 1)
    def _finalize():
        r2 = dm_ref[2:3, :]
        d2 = dm_ref[3:4, :]
        b2 = dm_ref[4:5, :]
        o = acc_ref[...] * r2 + he2_ref[...] * d2 + b2
        o_ref[...] = o.astype(o_ref.dtype)


# ------------------------------ wrapper ----------------------------------------

def _round_up(v, m):
    return ((v + m - 1) // m) * m


def prepare_wff_params(params):
    """One-time prep: transpose+cast shared weights, pack per-language vectors.

    Call once at init (NOT per forward) -- this is the hoisted HBM pass.
    """
    f32 = jnp.float32
    d_ff, d_model = params["w1"].shape
    lang = params["r1"].shape[0]
    w1t = jnp.asarray(params["w1"]).T.astype(jnp.bfloat16)   # (d_model, d_ff)
    w2t = jnp.asarray(params["w2"]).T.astype(jnp.bfloat16)   # (d_ff, d_model)
    b1 = jnp.broadcast_to(params["b1"].astype(f32)[None, :], (lang, d_ff))
    b2 = jnp.broadcast_to(params["b2"].astype(f32)[None, :], (lang, d_model))
    # (lang, 5, d_model): rows = [s1, e1, r2, d2, b2]
    dm_pack = jnp.stack([params["s1"].astype(f32), params["e1"].astype(f32),
                         params["r2"].astype(f32), params["d2"].astype(f32), b2],
                        axis=1)
    # (lang, 5, d_ff): rows = [r1, d1, b1, s2, e2]
    ff_pack = jnp.stack([params["r1"].astype(f32), params["d1"].astype(f32), b1,
                         params["s2"].astype(f32), params["e2"].astype(f32)],
                        axis=1)
    return {"w1t": w1t, "w2t": w2t, "dm_pack": dm_pack, "ff_pack": ff_pack,
            "d_model": d_model, "d_ff": d_ff}


def _pick_tile_ff(d_model, d_ff, want):
    if want is not None:
        return want if (want < d_ff and d_ff % want == 0) else d_ff
    # Full-d_ff weight tiles (double buffered, both layers, bf16) under ~24 MiB
    # -> single reduction step (no accumulator read-modify-write; v5e friendly).
    if 4 * d_model * d_ff * 2 <= (24 << 20):
        return d_ff
    for t in (512, 384, 256, 128):
        if t < d_ff and d_ff % t == 0:
            return t
    return d_ff


def wf_feed_forward(x, prepared, language_id, *, tile_n=512, tile_ff=None):
    """y = WFLinear2(relu(WFLinear1(x, lang)), lang); dropout = identity (eval)."""
    batch, seq, d_model = x.shape
    assert d_model == prepared["d_model"]
    d_ff = prepared["d_ff"]
    n = batch * seq

    tile_ff = _pick_tile_ff(d_model, d_ff, tile_ff)

    # Token tile: multiple of 16 (bf16 x*s1 scratch packs sublanes in pairs).
    tile_n = max(16, min(tile_n, _round_up(n, 16)))
    tile_n = _round_up(tile_n, 16)
    n_pad = _round_up(n, tile_n)

    x2 = x.reshape(n, d_model)
    if n_pad != n:
        x2 = jnp.pad(x2, ((0, n_pad - n), (0, 0)))

    w1t, w2t = prepared["w1t"], prepared["w2t"]
    dm = prepared["dm_pack"][language_id]   # (5, d_model) f32
    ff = prepared["ff_pack"][language_id]   # (5, d_ff)    f32

    n_tiles = n_pad // tile_n
    ff_tiles = d_ff // tile_ff

    xb = x2.dtype.itemsize
    ob = jnp.dtype(x.dtype).itemsize

    # Per-step VMEM working set (double-buffered pipeline + scratch), with headroom.
    est = (2 * tile_n * d_model * xb            # x tile
           + 2 * d_model * tile_ff * 2          # W1^T tile (bf16)
           + 2 * tile_ff * d_model * 2          # W2^T tile (bf16)
           + 2 * tile_n * d_model * ob          # out tile
           + 2 * 8 * d_model * 4                # dm pack (sublane-padded)
           + 2 * 8 * tile_ff * 4                # ff pack (sublane-padded)
           + tile_n * d_model * 4               # acc scratch
           + tile_n * d_model * 2               # x*s1 bf16 scratch
           + 2 * tile_n * 128 * 4)              # xe1/he2 (lane-padded)
    vmem_limit = int(min(max(int(est * 1.5) + (2 << 20), 32 << 20), 100 << 20))

    cost = pl.CostEstimate(
        flops=4 * n_pad * d_model * d_ff,       # two matmuls, 2 flops/MAC
        transcendentals=0,
        bytes_accessed=(x2.size * xb
                        + n_tiles * (w1t.size * 2 + w2t.size * 2)   # re-streamed weights
                        + n_pad * d_model * ob
                        + n_tiles * ff_tiles * (5 * tile_ff * 4) + 5 * d_model * 4),
    )

    out = pl.pallas_call(
        wff_kernel,
        out_shape=jax.ShapeDtypeStruct((n_pad, d_model), x.dtype),
        grid_spec=pltpu.PrefetchScalarGridSpec(
            num_scalar_prefetch=0,
            grid=(n_tiles, ff_tiles),
            in_specs=[
                pl.BlockSpec((tile_n, d_model), lambda i, j: (i, 0)),    # x tile
                pl.BlockSpec((d_model, tile_ff), lambda i, j: (0, j)),   # W1^T block
                pl.BlockSpec((tile_ff, d_model), lambda i, j: (j, 0)),   # W2^T block
                pl.BlockSpec((5, d_model), lambda i, j: (0, 0)),         # [s1,e1,r2,d2,b2]
                pl.BlockSpec((5, tile_ff), lambda i, j: (0, j)),         # [r1,d1,b1,s2,e2]
            ],
            out_specs=pl.BlockSpec((tile_n, d_model), lambda i, j: (i, 0)),
            scratch_shapes=[
                pltpu.VMEM((tile_n, d_model), jnp.float32),    # layer-2 accumulator
                pltpu.VMEM((tile_n, d_model), jnp.bfloat16),   # cached (x * s1) bf16
                pltpu.VMEM((tile_n, 1), jnp.float32),          # x . e1
                pltpu.VMEM((tile_n, 1), jnp.float32),          # sum_ff h . e2
            ],
        ),
        compiler_params=pltpu.CompilerParams(
            dimension_semantics=("parallel", "arbitrary"),
            vmem_limit_bytes=vmem_limit),
        cost_estimate=cost,
    )(x2, w1t, w2t, dm, ff)

    return out[:n].reshape(batch, seq, d_model)


# -------------------------- reference & test harness --------------------------

def _wf_effective_weight_T(w, r, s, d, e, language_id):
    r_l = r[language_id]  # (out,)
    s_l = s[language_id]  # (in,)
    d_l = d[language_id]  # (out,)
    e_l = e[language_id]  # (in,)
    w_eff = w * (r_l[:, None] * s_l[None, :]) + d_l[:, None] * e_l[None, :]
    return w_eff.T  # (in, out)


def reference(x, params, language_id):
    xf = x.reshape(-1, x.shape[-1]).astype(jnp.float32)
    w1t = _wf_effective_weight_T(params["w1"], params["r1"], params["s1"],
                                 params["d1"], params["e1"], language_id)
    w2t = _wf_effective_weight_T(params["w2"], params["r2"], params["s2"],
                                 params["d2"], params["e2"], language_id)
    h = jnp.maximum(xf @ w1t + params["b1"], 0.0)
    o = h @ w2t + params["b2"]
    return o.reshape(x.shape).astype(x.dtype)


def init_params(key, d_model, d_ff, language_num):
    ks = jax.random.split(key, 12)
    scale1 = 1.0 / jnp.sqrt(d_model)
    scale2 = 1.0 / jnp.sqrt(d_ff)
    return {
        # linear_1: d_model -> d_ff
        "w1": jax.random.uniform(ks[0], (d_ff, d_model), jnp.float32, -scale1, scale1),
        "b1": jax.random.uniform(ks[1], (d_ff,), jnp.float32, -scale1, scale1),
        "r1": 1.0 + 0.02 * jax.random.normal(ks[2], (language_num, d_ff), jnp.float32),
        "s1": 1.0 + 0.02 * jax.random.normal(ks[3], (language_num, d_model), jnp.float32),
        "d1": 0.02 * jax.random.normal(ks[4], (language_num, d_ff), jnp.float32),
        "e1": 0.02 * jax.random.normal(ks[5], (language_num, d_model), jnp.float32),
        # linear_2: d_ff -> d_model
        "w2": jax.random.uniform(ks[6], (d_model, d_ff), jnp.float32, -scale2, scale2),
        "b2": jax.random.uniform(ks[7], (d_model,), jnp.float32, -scale2, scale2),
        "r2": 1.0 + 0.02 * jax.random.normal(ks[8], (language_num, d_model), jnp.float32),
        "s2": 1.0 + 0.02 * jax.random.normal(ks[9], (language_num, d_ff), jnp.float32),
        "d2": 0.02 * jax.random.normal(ks[10], (language_num, d_model), jnp.float32),
        "e2": 0.02 * jax.random.normal(ks[11], (language_num, d_ff), jnp.float32),
    }


if __name__ == "__main__":
    d_model, d_ff, language_num = 128, 256, 3
    batch, seq = 2, 100          # N = 200 -> exercises padding
    language_id = 1

    key = jax.random.PRNGKey(0)
    kx, kp = jax.random.split(key)
    x = jax.random.normal(kx, (batch, seq, d_model), jnp.float32)
    params = init_params(kp, d_model, d_ff, language_num)

    # One-time prep (hoisted transpose + bf16 cast + per-language vector packing).
    prepared = prepare_wff_params(params)
    ref = reference(x, params, language_id)

    # Config 1: defaults (auto tile_ff -> d_ff at this size, single reduction step).
    out = wf_feed_forward(x, prepared, language_id)
    out = jax.block_until_ready(out)
    assert out.shape == (batch, seq, d_model)
    # bf16 matmul operands with f32 accumulation -> loosened tolerance vs f32 ref.
    assert jnp.allclose(out, ref, atol=3e-2, rtol=3e-2), "mismatch (default tiles)"

    # Config 2: forced multi-tile path (2 token tiles x 2 ff reduction steps).
    out2 = wf_feed_forward(x, prepared, language_id, tile_n=112, tile_ff=128)
    out2 = jax.block_until_ready(out2)
    assert jnp.allclose(out2, ref, atol=3e-2, rtol=3e-2), "mismatch (tiled path)"

    print("KERNEL_OK")
</pallas_src>

<mosaic_0001>
module attributes {stable_mosaic.version = 11 : i64} {
  func.func @wff_kernel(%arg0: i32, %arg1: i32, %arg2: memref<208x128xf32, #tpu.memory_space<vmem>>, %arg3: memref<128x256xbf16, #tpu.memory_space<vmem>>, %arg4: memref<256x128xbf16, #tpu.memory_space<vmem>>, %arg5: memref<5x128xf32, #tpu.memory_space<vmem>>, %arg6: memref<5x256xf32, #tpu.memory_space<vmem>>, %arg7: memref<208x128xf32, #tpu.memory_space<vmem>>, %arg8: memref<208x128xf32, #tpu.memory_space<vmem>>, %arg9: memref<208x128xbf16, #tpu.memory_space<vmem>>, %arg10: memref<208x1xf32, #tpu.memory_space<vmem>>, %arg11: memref<208x1xf32, #tpu.memory_space<vmem>>) attributes {dimension_semantics = [#tpu.dimension_semantics<parallel>, #tpu.dimension_semantics<arbitrary>], iteration_bounds = array<i64: 1, 1>, scalar_prefetch = 0 : i64, scratch_operands = 4 : i64, tpu.core_type = #tpu.core_type<tc>, window_params = [{transform_indices = @transform_0, window_bounds = array<i64: 208, 128>}, {transform_indices = @transform_1, window_bounds = array<i64: 128, 256>}, {transform_indices = @transform_2, window_bounds = array<i64: 256, 128>}, {pipeline_mode = #tpu.pipeline_mode<synchronous>, transform_indices = @transform_3, window_bounds = array<i64: 5, 128>}, {transform_indices = @transform_4, window_bounds = array<i64: 5, 256>}, {transform_indices = @transform_5, window_bounds = array<i64: 208, 128>}]} {
    %c0_i32 = arith.constant 0 : i32
    %0 = arith.cmpi eq, %arg1, %c0_i32 : i32
    %1 = arith.extui %0 : i1 to i32
    %c0_i32_0 = arith.constant 0 : i32
    %2 = arith.cmpi ne, %1, %c0_i32_0 : i32
    scf.if %2 {
      %c0_27 = arith.constant 0 : index
      %c0_28 = arith.constant 0 : index
      %40 = vector.load %arg2[%c0_27, %c0_28] : memref<208x128xf32, #tpu.memory_space<vmem>>, vector<208x128xf32>
      %c0_29 = arith.constant 0 : index
      %c0_30 = arith.constant 0 : index
      %41 = vector.load %arg5[%c0_29, %c0_30] : memref<5x128xf32, #tpu.memory_space<vmem>>, vector<1x128xf32>
      %c1_31 = arith.constant 1 : index
      %c0_32 = arith.constant 0 : index
      %42 = vector.load %arg5[%c1_31, %c0_32] : memref<5x128xf32, #tpu.memory_space<vmem>>, vector<1x128xf32>
      %cst_33 = arith.constant 0.000000e+00 : f32
      %43 = vector.broadcast %cst_33 : f32 to vector<208x128xf32>
      %c0_34 = arith.constant 0 : index
      %c0_35 = arith.constant 0 : index
      %44 = vector.load %arg8[%c0_34, %c0_35] : memref<208x128xf32, #tpu.memory_space<vmem>>, vector<208x128xf32>
      tpu.vector_store %arg8[%c0_34, %c0_35], %43 {strides = array<i32>} : memref<208x128xf32, #tpu.memory_space<vmem>>, vector<208x128xf32>,
      %cst_36 = arith.constant 0.000000e+00 : f32
      %45 = vector.broadcast %cst_36 : f32 to vector<208x1xf32>
      %c0_37 = arith.constant 0 : index
      %c0_38 = arith.constant 0 : index
      %46 = vector.load %arg11[%c0_37, %c0_38] : memref<208x1xf32, #tpu.memory_space<vmem>>, vector<208x1xf32>
      tpu.vector_store %arg11[%c0_37, %c0_38], %45 {strides = array<i32>} : memref<208x1xf32, #tpu.memory_space<vmem>>, vector<208x1xf32>,
      %47 = vector.broadcast %42 : vector<1x128xf32> to vector<208x128xf32>
      %48 = arith.mulf %40, %47 : vector<208x128xf32>
      %cst_39 = arith.constant dense<0.000000e+00> : vector<208xf32>
      %49 = vector.multi_reduction <add>, %48, %cst_39 [1] : vector<208x128xf32> to vector<208xf32>
      %50 = vector.shape_cast %49 : vector<208xf32> to vector<208x1xf32>
      %c0_40 = arith.constant 0 : index
      %c0_41 = arith.constant 0 : index
      %51 = vector.load %arg10[%c0_40, %c0_41] : memref<208x1xf32, #tpu.memory_space<vmem>>, vector<208x1xf32>
      tpu.vector_store %arg10[%c0_40, %c0_41], %50 {strides = array<i32>} : memref<208x1xf32, #tpu.memory_space<vmem>>, vector<208x1xf32>,
      %52 = vector.broadcast %41 : vector<1x128xf32> to vector<208x128xf32>
      %53 = arith.mulf %40, %52 : vector<208x128xf32>
      %54 = arith.truncf %53 : vector<208x128xf32> to vector<208x128xbf16>
      %c0_42 = arith.constant 0 : index
      %c0_43 = arith.constant 0 : index
      %55 = vector.load %arg9[%c0_42, %c0_43] : memref<208x128xbf16, #tpu.memory_space<vmem>>, vector<208x128xbf16>
      tpu.vector_store %arg9[%c0_42, %c0_43], %54 {strides = array<i32>} : memref<208x128xbf16, #tpu.memory_space<vmem>>, vector<208x128xbf16>,
    } else {
    }
    %c0 = arith.constant 0 : index
    %c0_1 = arith.constant 0 : index
    %3 = vector.load %arg6[%c0, %c0_1] : memref<5x256xf32, #tpu.memory_space<vmem>>, vector<1x256xf32>
    %c1 = arith.constant 1 : index
    %c0_2 = arith.constant 0 : index
    %4 = vector.load %arg6[%c1, %c0_2] : memref<5x256xf32, #tpu.memory_space<vmem>>, vector<1x256xf32>
    %c2 = arith.constant 2 : index
    %c0_3 = arith.constant 0 : index
    %5 = vector.load %arg6[%c2, %c0_3] : memref<5x256xf32, #tpu.memory_space<vmem>>, vector<1x256xf32>
    %c3 = arith.constant 3 : index
    %c0_4 = arith.constant 0 : index
    %6 = vector.load %arg6[%c3, %c0_4] : memref<5x256xf32, #tpu.memory_space<vmem>>, vector<1x256xf32>
    %c4 = arith.constant 4 : index
    %c0_5 = arith.constant 0 : index
    %7 = vector.load %arg6[%c4, %c0_5] : memref<5x256xf32, #tpu.memory_space<vmem>>, vector<1x256xf32>
    %c0_6 = arith.constant 0 : index
    %c0_7 = arith.constant 0 : index
    %8 = vector.load %arg9[%c0_6, %c0_7] : memref<208x128xbf16, #tpu.memory_space<vmem>>, vector<208x128xbf16>
    %c0_8 = arith.constant 0 : index
    %c0_9 = arith.constant 0 : index
    %9 = vector.load %arg3[%c0_8, %c0_9] : memref<128x256xbf16, #tpu.memory_space<vmem>>, vector<128x256xbf16>
    %cst = arith.constant dense<0.000000e+00> : vector<208x256xf32>
    %10 = tpu.matmul %8, %9, %cst {dimension_numbers = #tpu.dot_dimension_numbers<[1], [0], [0], [1], [0, 0, 1, 1], [], []>} : vector<208x128xbf16>, vector<128x256xbf16>, vector<208x256xf32> -> vector<208x256xf32>
    %11 = vector.broadcast %3 : vector<1x256xf32> to vector<208x256xf32>
    %12 = arith.mulf %10, %11 : vector<208x256xf32>
    %c0_10 = arith.constant 0 : index
    %c0_11 = arith.constant 0 : index
    %13 = vector.load %arg10[%c0_10, %c0_11] : memref<208x1xf32, #tpu.memory_space<vmem>>, vector<208x1xf32>
    %14 = vector.broadcast %13 : vector<208x1xf32> to vector<208x256xf32>
    %15 = vector.broadcast %4 : vector<1x256xf32> to vector<208x256xf32>
    %16 = arith.mulf %14, %15 : vector<208x256xf32>
    %17 = arith.addf %12, %16 : vector<208x256xf32>
    %18 = vector.broadcast %5 : vector<1x256xf32> to vector<208x256xf32>
    %19 = arith.addf %17, %18 : vector<208x256xf32>
    %cst_12 = arith.constant 0.000000e+00 : f32
    %20 = vector.broadcast %cst_12 : f32 to vector<208x256xf32>
    %21 = arith.maximumf %19, %20 : vector<208x256xf32>
    %22 = vector.broadcast %6 : vector<1x256xf32> to vector<208x256xf32>
    %23 = arith.mulf %21, %22 : vector<208x256xf32>
    %24 = arith.truncf %23 : vector<208x256xf32> to vector<208x256xbf16>
    %c0_13 = arith.constant 0 : index
    %c0_14 = arith.constant 0 : index
    %25 = vector.load %arg8[%c0_13, %c0_14] : memref<208x128xf32, #tpu.memory_space<vmem>>, vector<208x128xf32>
    %c0_15 = arith.constant 0 : index
    %c0_16 = arith.constant 0 : index
    %26 = vector.load %arg4[%c0_15, %c0_16] : memref<256x128xbf16, #tpu.memory_space<vmem>>, vector<256x128xbf16>
    %cst_17 = arith.constant dense<0.000000e+00> : vector<208x128xf32>
    %27 = tpu.matmul %24, %26, %cst_17 {dimension_numbers = #tpu.dot_dimension_numbers<[1], [0], [0], [1], [0, 0, 1, 1], [], []>} : vector<208x256xbf16>, vector<256x128xbf16>, vector<208x128xf32> -> vector<208x128xf32>
    %28 = arith.addf %25, %27 : vector<208x128xf32>
    %c0_18 = arith.constant 0 : index
    %c0_19 = arith.constant 0 : index
    %29 = vector.load %arg8[%c0_18, %c0_19] : memref<208x128xf32, #tpu.memory_space<vmem>>, vector<208x128xf32>
    tpu.vector_store %arg8[%c0_18, %c0_19], %28 {strides = array<i32>} : memref<208x128xf32, #tpu.memory_space<vmem>>, vector<208x128xf32>,
    %c0_20 = arith.constant 0 : index
    %c0_21 = arith.constant 0 : index
    %30 = vector.load %arg11[%c0_20, %c0_21] : memref<208x1xf32, #tpu.memory_space<vmem>>, vector<208x1xf32>
    %31 = vector.broadcast %7 : vector<1x256xf32> to vector<208x256xf32>
    %32 = arith.mulf %21, %31 : vector<208x256xf32>
    %cst_22 = arith.constant dense<0.000000e+00> : vector<208xf32>
    %33 = vector.multi_reduction <add>, %32, %cst_22 [1] : vector<208x256xf32> to vector<208xf32>
    %34 = vector.shape_cast %33 : vector<208xf32> to vector<208x1xf32>
    %35 = arith.addf %30, %34 : vector<208x1xf32>
    %c0_23 = arith.constant 0 : index
    %c0_24 = arith.constant 0 : index
    %36 = vector.load %arg11[%c0_23, %c0_24] : memref<208x1xf32, #tpu.memory_space<vmem>>, vector<208x1xf32>
    tpu.vector_store %arg11[%c0_23, %c0_24], %35 {strides = array<i32>} : memref<208x1xf32, #tpu.memory_space<vmem>>, vector<208x1xf32>,
    %c0_i32_25 = arith.constant 0 : i32
    %37 = arith.cmpi eq, %arg1, %c0_i32_25 : i32
    %38 = arith.extui %37 : i1 to i32
    %c0_i32_26 = arith.constant 0 : i32
    %39 = arith.cmpi ne, %38, %c0_i32_26 : i32
    scf.if %39 {
      %c2_27 = arith.constant 2 : index
      %c0_28 = arith.constant 0 : index
      %40 = vector.load %arg5[%c2_27, %c0_28] : memref<5x128xf32, #tpu.memory_space<vmem>>, vector<1x128xf32>
      %c3_29 = arith.constant 3 : index
      %c0_30 = arith.constant 0 : index
      %41 = vector.load %arg5[%c3_29, %c0_30] : memref<5x128xf32, #tpu.memory_space<vmem>>, vector<1x128xf32>
      %c4_31 = arith.constant 4 : index
      %c0_32 = arith.constant 0 : index
      %42 = vector.load %arg5[%c4_31, %c0_32] : memref<5x128xf32, #tpu.memory_space<vmem>>, vector<1x128xf32>
      %c0_33 = arith.constant 0 : index
      %c0_34 = arith.constant 0 : index
      %43 = vector.load %arg8[%c0_33, %c0_34] : memref<208x128xf32, #tpu.memory_space<vmem>>, vector<208x128xf32>
      %44 = vector.broadcast %40 : vector<1x128xf32> to vector<208x128xf32>
      %45 = arith.mulf %43, %44 : vector<208x128xf32>
      %c0_35 = arith.constant 0 : index
      %c0_36 = arith.constant 0 : index
      %46 = vector.load %arg11[%c0_35, %c0_36] : memref<208x1xf32, #tpu.memory_space<vmem>>, vector<208x1xf32>
      %47 = vector.broadcast %46 : vector<208x1xf32> to vector<208x128xf32>
      %48 = vector.broadcast %41 : vector<1x128xf32> to vector<208x128xf32>
      %49 = arith.mulf %47, %48 : vector<208x128xf32>
      %50 = arith.addf %45, %49 : vector<208x128xf32>
      %51 = vector.broadcast %42 : vector<1x128xf32> to vector<208x128xf32>
      %52 = arith.addf %50, %51 : vector<208x128xf32>
      %c0_37 = arith.constant 0 : index
      %c0_38 = arith.constant 0 : index
      %53 = vector.load %arg7[%c0_37, %c0_38] : memref<208x128xf32, #tpu.memory_space<vmem>>, vector<208x128xf32>
      tpu.vector_store %arg7[%c0_37, %c0_38], %52 {strides = array<i32>} : memref<208x128xf32, #tpu.memory_space<vmem>>, vector<208x128xf32>,
    } else {
    }
    return
  }
  func.func @transform_0(%arg0: i32, %arg1: i32) -> (i32, i32) {
    %c0_i32 = arith.constant 0 : i32
    %c0_i32_0 = arith.constant 0 : i32
    return %arg0, %c0_i32 : i32, i32
  }
  func.func @transform_1(%arg0: i32, %arg1: i32) -> (i32, i32) {
    %c0_i32 = arith.constant 0 : i32
    %c0_i32_0 = arith.constant 0 : i32
    return %c0_i32, %arg1 : i32, i32
  }
  func.func @transform_2(%arg0: i32, %arg1: i32) -> (i32, i32) {
    %c0_i32 = arith.constant 0 : i32
    %c0_i32_0 = arith.constant 0 : i32
    return %arg1, %c0_i32 : i32, i32
  }
  func.func @transform_3(%arg0: i32, %arg1: i32) -> (i32, i32) {
    %c0_i32 = arith.constant 0 : i32
    %c0_i32_0 = arith.constant 0 : i32
    %c0_i32_1 = arith.constant 0 : i32
    return %c0_i32, %c0_i32_0 : i32, i32
  }
  func.func @transform_4(%arg0: i32, %arg1: i32) -> (i32, i32) {
    %c0_i32 = arith.constant 0 : i32
    %c0_i32_0 = arith.constant 0 : i32
    return %c0_i32, %arg1 : i32, i32
  }
  func.func @transform_5(%arg0: i32, %arg1: i32) -> (i32, i32) {
    %c0_i32 = arith.constant 0 : i32
    %c0_i32_0 = arith.constant 0 : i32
    return %arg0, %c0_i32 : i32, i32
  }
}

</mosaic_0001>

<llo_original>
// kernel: tpu_custom_call.1
$region0: #{tpu_custom_call.1}
  #allocation0 [shape = 'u32[]', space=smem, size = 0x4, offset = 0x4, fixed_abs, tag = 'smem constant byte address 0x4 - core index']
  #allocation1 [shape = 'u32[144,128]{1,0:T(1,128)}', space=vmem, size = 0x12000, scoped, tag = 'internal scratch']
  #allocation2 [shape = 'f32[208,128]{1,0:T(8,128)}', space=vmem, size = 0x1a000, scoped, tag = 'scratch operand']
  #allocation3 [shape = 'bf16[208,128]{1,0:T(16,128)(2,1)}', space=vmem, size = 0xd000, scoped, tag = 'scratch operand']
  #allocation4 [shape = 'f32[208,1]{1,0:T(8,128)}', space=vmem, size = 0x1a000, scoped, tag = 'scratch operand']
  #allocation5 [shape = 'f32[208,1]{1,0:T(8,128)}', space=vmem, size = 0x1a000, scoped, tag = 'scratch operand']
  %s0 = inlined_call_operand.hbm [shape: f32[208,128], index: 0, kind: input, shape index: {}]
  %s1 = inlined_call_operand.hbm [shape: bf16[128,256], index: 1, kind: input, shape index: {}]
  %s2 = inlined_call_operand.hbm [shape: bf16[256,128], index: 2, kind: input, shape index: {}]
  %s3 = inlined_call_operand.vmem [shape: f32[5,128], index: 3, kind: input, shape index: {}]
  %s4 = inlined_call_operand.hbm [shape: f32[5,256], index: 4, kind: input, shape index: {}]
  %s5 = inlined_call_operand.hbm [shape: f32[208,128], index: 5, kind: output, shape index: {}]
  %s6 = sld [smem:[#allocation0]]
  $region54: #{tpu_custom_call.1} parent=0
    _
  %s8 = ssub.s32 1, %s6
  %s9 = scalar_select 0, %s8, %s6
  $region1: #{tpu_custom_call.1} parent=0
    #allocation6 [shape = 'u8[106496]{0}', space=vmem, size = 0x1a000, scoped, tag = 'input window, operand 0, single buffered']
    #allocation7 [shape = 's32[1]{0}', space=sflag, size = 0x4, scoped, tag = 'scoped memory for tpu_custom_call.1']
    #allocation8 [shape = 's32[1]{0}', space=sflag, size = 0x4, scoped, tag = 'scoped memory for tpu_custom_call.1']
    #allocation9 [shape = 'u8[65536]{0}', space=vmem, size = 0x10000, scoped, tag = 'input window, operand 1, single buffered']
    #allocation10 [shape = 's32[1]{0}', space=sflag, size = 0x4, scoped, tag = 'scoped memory for tpu_custom_call.1']
    #allocation11 [shape = 'u8[65536]{0}', space=vmem, size = 0x10000, scoped, tag = 'input window, operand 2, single buffered']
    #allocation12 [shape = 'u8[8192]{0}', space=vmem, size = 0x2000, scoped, tag = 'input window, operand 4, single buffered']
    #allocation13 [shape = 's32[1]{0}', space=sflag, size = 0x4, scoped, tag = 'scoped memory for tpu_custom_call.1']
    #allocation14 [shape = 'u8[106496]{0}', space=vmem, size = 0x1a000, scoped, tag = 'output window, operand 0, single buffered']
    %10 = vsyncpa [#allocation7], 0
    %11 = vsyncpa [#allocation10], 0
    %12 = vsyncpa [#allocation13], 0
    %13 = vsyncpa [#allocation8], 0
    // Predicated region
    $region2: #{tpu_custom_call.1} parent=1 // pred_check
      _
    $region3: #{tpu_custom_call.1} parent=1 // pred_check_branch
      %15 = sbr.rel (0) target = $region5
    $region4: #{tpu_custom_call.1} parent=1 // pred_region
      %s17 = ssub.s32 3328, 3328
      %18 = vsyncadd [#allocation7], %s17
      %s19 = sshll.u32 [#allocation6], 4
      %s20 = int_to_ptr.vmem [resolvable:$true] %s19
      %25 = dma.hbm_to_vmem [thread:$0]  %s0, 3328, %s20, [#allocation7], 128, 128, 8
    $region5: #{tpu_custom_call.1} parent=1 // pred_fallthru
      _
    // Predicated region
    $region6: #{tpu_custom_call.1} parent=1 // pred_check
      _
    $region7: #{tpu_custom_call.1} parent=1 // pred_check_branch
      %27 = sbr.rel (0) target = $region9
    $region8: #{tpu_custom_call.1} parent=1 // pred_region
      %s29 = ssub.s32 2048, 2048
      %30 = vsyncadd [#allocation10], %s29
      %s31 = sshll.u32 [#allocation9], 4
      %s32 = int_to_ptr.vmem [resolvable:$true] %s31
      %37 = dma.hbm_to_vmem [thread:$0]  %s1, 2048, %s32, [#allocation10], 128, 128, 8
    $region9: #{tpu_custom_call.1} parent=1 // pred_fallthru
      _
    // Predicated region
    $region10: #{tpu_custom_call.1} parent=1 // pred_check
      _
    $region11: #{tpu_custom_call.1} parent=1 // pred_check_branch
      %39 = sbr.rel (0) target = $region13
    $region12: #{tpu_custom_call.1} parent=1 // pred_region
      %s41 = ssub.s32 2048, 2048
      %42 = vsyncadd [#allocation10], %s41
      %s43 = sshll.u32 [#allocation11], 4
      %s44 = int_to_ptr.vmem [resolvable:$true] %s43
      %49 = dma.hbm_to_vmem [thread:$0]  %s2, 2048, %s44, [#allocation10], 64, 64, 4
    $region13: #{tpu_custom_call.1} parent=1 // pred_fallthru
      _
    // Predicated region
    $region14: #{tpu_custom_call.1} parent=1 // pred_check
      _
    $region15: #{tpu_custom_call.1} parent=1 // pred_check_branch
      %51 = sbr.rel (0) target = $region17
    $region16: #{tpu_custom_call.1} parent=1 // pred_region
      _
    $region17: #{tpu_custom_call.1} parent=1 // pred_fallthru
      _
    // Predicated region
    $region18: #{tpu_custom_call.1} parent=1 // pred_check
      _
    $region19: #{tpu_custom_call.1} parent=1 // pred_check_branch
      %53 = sbr.rel (0) target = $region21
    $region20: #{tpu_custom_call.1} parent=1 // pred_region
      %s55 = ssub.s32 256, 256
      %56 = vsyncadd [#allocation13], %s55
      %s58 = sshll.u32 [#allocation12], 4
      %s59 = int_to_ptr.vmem [resolvable:$true] %s58
      %61 = dma.hbm_to_vmem [thread:$0]  %s4, 256, %s59, [#allocation13]
    $region21: #{tpu_custom_call.1} parent=1 // pred_fallthru
      _
    // Predicated region
    $region22: #{tpu_custom_call.1} parent=1 // pred_check
      _
    $region23: #{tpu_custom_call.1} parent=1 // pred_check_branch
      %63 = sbr.rel (0) target = $region25
    $region24: #{tpu_custom_call.1} parent=1 // pred_region
      %64 = dma.done [#allocation7], 3328
    $region25: #{tpu_custom_call.1} parent=1 // pred_fallthru
      _
    // Predicated region
    $region26: #{tpu_custom_call.1} parent=1 // pred_check
      _
    $region27: #{tpu_custom_call.1} parent=1 // pred_check_branch
      %66 = sbr.rel (0) target = $region29
    $region28: #{tpu_custom_call.1} parent=1 // pred_region
      %67 = dma.done [#allocation10], 2048
    $region29: #{tpu_custom_call.1} parent=1 // pred_fallthru
      _
    // Predicated region
    $region30: #{tpu_custom_call.1} parent=1 // pred_check
      _
    $region31: #{tpu_custom_call.1} parent=1 // pred_check_branch
      %69 = sbr.rel (0) target = $region33
    $region32: #{tpu_custom_call.1} parent=1 // pred_region
      %70 = dma.done [#allocation10], 2048
    $region33: #{tpu_custom_call.1} parent=1 // pred_fallthru
      _
    // Predicated region
    $region34: #{tpu_custom_call.1} parent=1 // pred_check
      _
    $region35: #{tpu_custom_call.1} parent=1 // pred_check_branch
      %72 = sbr.rel (0) target = $region37
    $region36: #{tpu_custom_call.1} parent=1 // pred_region
      %73 = dma.done [#allocation13], 256
    $region37: #{tpu_custom_call.1} parent=1 // pred_fallthru
      _
    %p75 = scmp.eq.s32.totalorder 0, 0
    // Predicated region
    $region38: #{tpu_custom_call.1} parent=1 // pred_check
      %p76 = pneg %p75
    $region39: #{tpu_custom_call.1} parent=1 // pred_check_branch
      %78 = sbr.rel (%p76) target = $region41
    $region40: #{tpu_custom_call.1} parent=1 // pred_region
      %v79 = vld [vmem:[#allocation6] sm:$0xff]
      %v80 = vld [vmem:[#allocation6 + $0x8] sm:$0xff]
      %v81 = vld [vmem:[#allocation6 + $0x10] sm:$0xff]
      %v82 = vld [vmem:[#allocation6 + $0x18] sm:$0xff]
      %v83 = vld [vmem:[#allocation6 + $0x20] sm:$0xff]
      %v84 = vld [vmem:[#allocation6 + $0x28] sm:$0xff]
      %v85 = vld [vmem:[#allocation6 + $0x30] sm:$0xff]
      %v86 = vld [vmem:[#allocation6 + $0x38] sm:$0xff]
      %v87 = vld [vmem:[#allocation6 + $0x40] sm:$0xff]
      %v88 = vld [vmem:[#allocation6 + $0x48] sm:$0xff]
      %v89 = vld [vmem:[#allocation6 + $0x50] sm:$0xff]
      %v90 = vld [vmem:[#allocation6 + $0x58] sm:$0xff]
      %v91 = vld [vmem:[#allocation6 + $0x60] sm:$0xff]
      %v92 = vld [vmem:[#allocation6 + $0x68] sm:$0xff]
      %v93 = vld [vmem:[#allocation6 + $0x70] sm:$0xff]
      %v94 = vld [vmem:[#allocation6 + $0x78] sm:$0xff]
      %v95 = vld [vmem:[#allocation6 + $0x80] sm:$0xff]
      %v96 = vld [vmem:[#allocation6 + $0x88] sm:$0xff]
      %v97 = vld [vmem:[#allocation6 + $0x90] sm:$0xff]
      %v98 = vld [vmem:[#allocation6 + $0x98] sm:$0xff]
      %v99 = vld [vmem:[#allocation6 + $0xa0] sm:$0xff]
      %v100 = vld [vmem:[#allocation6 + $0xa8] sm:$0xff]
      %v101 = vld [vmem:[#allocation6 + $0xb0] sm:$0xff]
      %v102 = vld [vmem:[#allocation6 + $0xb8] sm:$0xff]
      %v103 = vld [vmem:[#allocation6 + $0xc0] sm:$0xff]
      %v104 = vld [vmem:[#allocation6 + $0xc8] sm:$0xff]
      %v105 = vld [vmem:[%s3] sm:$0x1]
      %v106 = vld [vmem:[%s3 + $0x1] sm:$0x1]
      %107 = vst [vmem:[#allocation2] sm:$0xff] 0.0
      %108 = vst [vmem:[#allocation2 + $0x8] sm:$0xff] 0.0
      %109 = vst [vmem:[#allocation2 + $0x10] sm:$0xff] 0.0
      %110 = vst [vmem:[#allocation2 + $0x18] sm:$0xff] 0.0
      %111 = vst [vmem:[#allocation2 + $0x20] sm:$0xff] 0.0
      %112 = vst [vmem:[#allocation2 + $0x28] sm:$0xff] 0.0
      %113 = vst [vmem:[#allocation2 + $0x30] sm:$0xff] 0.0
      %114 = vst [vmem:[#allocation2 + $0x38] sm:$0xff] 0.0
      %115 = vst [vmem:[#allocation2 + $0x40] sm:$0xff] 0.0
      %116 = vst [vmem:[#allocation2 + $0x48] sm:$0xff] 0.0
      %117 = vst [vmem:[#allocation2 + $0x50] sm:$0xff] 0.0
      %118 = vst [vmem:[#allocation2 + $0x58] sm:$0xff] 0.0
      %119 = vst [vmem:[#allocation2 + $0x60] sm:$0xff] 0.0
      %120 = vst [vmem:[#allocation2 + $0x68] sm:$0xff] 0.0
      %121 = vst [vmem:[#allocation2 + $0x70] sm:$0xff] 0.0
      %122 = vst [vmem:[#allocation2 + $0x78] sm:$0xff] 0.0
      %123 = vst [vmem:[#allocation2 + $0x80] sm:$0xff] 0.0
      %124 = vst [vmem:[#allocation2 + $0x88] sm:$0xff] 0.0
      %125 = vst [vmem:[#allocation2 + $0x90] sm:$0xff] 0.0
      %126 = vst [vmem:[#allocation2 + $0x98] sm:$0xff] 0.0
      %127 = vst [vmem:[#allocation2 + $0xa0] sm:$0xff] 0.0
      %128 = vst [vmem:[#allocation2 + $0xa8] sm:$0xff] 0.0
      %129 = vst [vmem:[#allocation2 + $0xb0] sm:$0xff] 0.0
      %130 = vst [vmem:[#allocation2 + $0xb8] sm:$0xff] 0.0
      %131 = vst [vmem:[#allocation2 + $0xc0] sm:$0xff] 0.0
      %132 = vst [vmem:[#allocation2 + $0xc8] sm:$0xff] 0.0
      %vm133 = vcmask 7168
      %134 = vst.msk [vmem:[#allocation5] sm:$0xff] %vm133, 0.0
      %135 = vst.msk [vmem:[#allocation5 + $0x8] sm:$0xff] %vm133, 0.0
      %136 = vst.msk [vmem:[#allocation5 + $0x10] sm:$0xff] %vm133, 0.0
      %137 = vst.msk [vmem:[#allocation5 + $0x18] sm:$0xff] %vm133, 0.0
      %138 = vst.msk [vmem:[#allocation5 + $0x20] sm:$0xff] %vm133, 0.0
      %139 = vst.msk [vmem:[#allocation5 + $0x28] sm:$0xff] %vm133, 0.0
      %140 = vst.msk [vmem:[#allocation5 + $0x30] sm:$0xff] %vm133, 0.0
      %141 = vst.msk [vmem:[#allocation5 + $0x38] sm:$0xff] %vm133, 0.0
      %142 = vst.msk [vmem:[#allocation5 + $0x40] sm:$0xff] %vm133, 0.0
      %143 = vst.msk [vmem:[#allocation5 + $0x48] sm:$0xff] %vm133, 0.0
      %144 = vst.msk [vmem:[#allocation5 + $0x50] sm:$0xff] %vm133, 0.0
      %145 = vst.msk [vmem:[#allocation5 + $0x58] sm:$0xff] %vm133, 0.0
      %146 = vst.msk [vmem:[#allocation5 + $0x60] sm:$0xff] %vm133, 0.0
      %147 = vst.msk [vmem:[#allocation5 + $0x68] sm:$0xff] %vm133, 0.0
      %148 = vst.msk [vmem:[#allocation5 + $0x70] sm:$0xff] %vm133, 0.0
      %149 = vst.msk [vmem:[#allocation5 + $0x78] sm:$0xff] %vm133, 0.0
      %150 = vst.msk [vmem:[#allocation5 + $0x80] sm:$0xff] %vm133, 0.0
      %151 = vst.msk [vmem:[#allocation5 + $0x88] sm:$0xff] %vm133, 0.0
      %152 = vst.msk [vmem:[#allocation5 + $0x90] sm:$0xff] %vm133, 0.0
      %153 = vst.msk [vmem:[#allocation5 + $0x98] sm:$0xff] %vm133, 0.0
      %154 = vst.msk [vmem:[#allocation5 + $0xa0] sm:$0xff] %vm133, 0.0
      %155 = vst.msk [vmem:[#allocation5 + $0xa8] sm:$0xff] %vm133, 0.0
      %156 = vst.msk [vmem:[#allocation5 + $0xb0] sm:$0xff] %vm133, 0.0
      %157 = vst.msk [vmem:[#allocation5 + $0xb8] sm:$0xff] %vm133, 0.0
      %158 = vst.msk [vmem:[#allocation5 + $0xc0] sm:$0xff] %vm133, 0.0
      %159 = vst.msk [vmem:[#allocation5 + $0xc8] sm:$0xff] %vm133, 0.0
      %v160 = vlaneseq
      %v161 = vshrl.u32 %v160, 7
      %v162 = vsub.s32 0, %v161
      %v163 = vrot.slane %v106, %v162
      %v164 = vmul.f32 %v79, %v163
      %v165 = vmul.f32 %v80, %v163
      %v166 = vmul.f32 %v81, %v163
      %v167 = vmul.f32 %v82, %v163
      %v168 = vmul.f32 %v83, %v163
      %v169 = vmul.f32 %v84, %v163
      %v170 = vmul.f32 %v85, %v163
      %v171 = vmul.f32 %v86, %v163
      %v172 = vmul.f32 %v87, %v163
      %v173 = vmul.f32 %v88, %v163
      %v174 = vmul.f32 %v89, %v163
      %v175 = vmul.f32 %v90, %v163
      %v176 = vmul.f32 %v91, %v163
      %v177 = vmul.f32 %v92, %v163
      %v178 = vmul.f32 %v93, %v163
      %v179 = vmul.f32 %v94, %v163
      %v180 = vmul.f32 %v95, %v163
      %v181 = vmul.f32 %v96, %v163
      %v182 = vmul.f32 %v97, %v163
      %v183 = vmul.f32 %v98, %v163
      %v184 = vmul.f32 %v99, %v163
      %v185 = vmul.f32 %v100, %v163
      %v186 = vmul.f32 %v101, %v163
      %v187 = vmul.f32 %v102, %v163
      %v188 = vmul.f32 %v103, %v163
      %v189 = vmul.f32 %v104, %v163
      %190 = vadd.xlane.f32.xlu0 %v164
      %v191 = vpop.xlane.xlu0 %190
      %192 = vadd.xlane.f32.xlu0 %v165
      %v193 = vpop.xlane.xlu0 %192
      %194 = vadd.xlane.f32.xlu0 %v166
      %v195 = vpop.xlane.xlu0 %194
      %196 = vadd.xlane.f32.xlu0 %v167
      %v197 = vpop.xlane.xlu0 %196
      %198 = vadd.xlane.f32.xlu0 %v168
      %v199 = vpop.xlane.xlu0 %198
      %200 = vadd.xlane.f32.xlu0 %v169
      %v201 = vpop.xlane.xlu0 %200
      %202 = vadd.xlane.f32.xlu0 %v170
      %v203 = vpop.xlane.xlu0 %202
      %204 = vadd.xlane.f32.xlu0 %v171
      %v205 = vpop.xlane.xlu0 %204
      %206 = vadd.xlane.f32.xlu0 %v172
      %v207 = vpop.xlane.xlu0 %206
      %208 = vadd.xlane.f32.xlu0 %v173
      %v209 = vpop.xlane.xlu0 %208
      %210 = vadd.xlane.f32.xlu0 %v174
      %v211 = vpop.xlane.xlu0 %210
      %212 = vadd.xlane.f32.xlu0 %v175
      %v213 = vpop.xlane.xlu0 %212
      %214 = vadd.xlane.f32.xlu0 %v176
      %v215 = vpop.xlane.xlu0 %214
      %216 = vadd.xlane.f32.xlu0 %v177
      %v217 = vpop.xlane.xlu0 %216
      %218 = vadd.xlane.f32.xlu0 %v178
      %v219 = vpop.xlane.xlu0 %218
      %220 = vadd.xlane.f32.xlu0 %v179
      %v221 = vpop.xlane.xlu0 %220
      %222 = vadd.xlane.f32.xlu0 %v180
      %v223 = vpop.xlane.xlu0 %222
      %224 = vadd.xlane.f32.xlu0 %v181
      %v225 = vpop.xlane.xlu0 %224
      %226 = vadd.xlane.f32.xlu0 %v182
      %v227 = vpop.xlane.xlu0 %226
      %228 = vadd.xlane.f32.xlu0 %v183
      %v229 = vpop.xlane.xlu0 %228
      %230 = vadd.xlane.f32.xlu0 %v184
      %v231 = vpop.xlane.xlu0 %230
      %232 = vadd.xlane.f32.xlu0 %v185
      %v233 = vpop.xlane.xlu0 %232
      %234 = vadd.xlane.f32.xlu0 %v186
      %v235 = vpop.xlane.xlu0 %234
      %236 = vadd.xlane.f32.xlu0 %v187
      %v237 = vpop.xlane.xlu0 %236
      %238 = vadd.xlane.f32.xlu0 %v188
      %v239 = vpop.xlane.xlu0 %238
      %240 = vadd.xlane.f32.xlu0 %v189
      %v241 = vpop.xlane.xlu0 %240
      %242 = vst.msk [vmem:[#allocation4] sm:$0xff] %vm133, %v191
      %243 = vst.msk [vmem:[#allocation4 + $0x8] sm:$0xff] %vm133, %v193
      %244 = vst.msk [vmem:[#allocation4 + $0x10] sm:$0xff] %vm133, %v195
      %245 = vst.msk [vmem:[#allocation4 + $0x18] sm:$0xff] %vm133, %v197
      %246 = vst.msk [vmem:[#allocation4 + $0x20] sm:$0xff] %vm133, %v199
      %247 = vst.msk [vmem:[#allocation4 + $0x28] sm:$0xff] %vm133, %v201
      %248 = vst.msk [vmem:[#allocation4 + $0x30] sm:$0xff] %vm133, %v203
      %249 = vst.msk [vmem:[#allocation4 + $0x38] sm:$0xff] %vm133, %v205
      %250 = vst.msk [vmem:[#allocation4 + $0x40] sm:$0xff] %vm133, %v207
      %251 = vst.msk [vmem:[#allocation4 + $0x48] sm:$0xff] %vm133, %v209
      %252 = vst.msk [vmem:[#allocation4 + $0x50] sm:$0xff] %vm133, %v211
      %253 = vst.msk [vmem:[#allocation4 + $0x58] sm:$0xff] %vm133, %v213
      %254 = vst.msk [vmem:[#allocation4 + $0x60] sm:$0xff] %vm133, %v215
      %255 = vst.msk [vmem:[#allocation4 + $0x68] sm:$0xff] %vm133, %v217
      %256 = vst.msk [vmem:[#allocation4 + $0x70] sm:$0xff] %vm133, %v219
      %257 = vst.msk [vmem:[#allocation4 + $0x78] sm:$0xff] %vm133, %v221
      %258 = vst.msk [vmem:[#allocation4 + $0x80] sm:$0xff] %vm133, %v223
      %259 = vst.msk [vmem:[#allocation4 + $0x88] sm:$0xff] %vm133, %v225
      %260 = vst.msk [vmem:[#allocation4 + $0x90] sm:$0xff] %vm133, %v227
      %261 = vst.msk [vmem:[#allocation4 + $0x98] sm:$0xff] %vm133, %v229
      %262 = vst.msk [vmem:[#allocation4 + $0xa0] sm:$0xff] %vm133, %v231
      %263 = vst.msk [vmem:[#allocation4 + $0xa8] sm:$0xff] %vm133, %v233
      %264 = vst.msk [vmem:[#allocation4 + $0xb0] sm:$0xff] %vm133, %v235
      %265 = vst.msk [vmem:[#allocation4 + $0xb8] sm:$0xff] %vm133, %v237
      %266 = vst.msk [vmem:[#allocation4 + $0xc0] sm:$0xff] %vm133, %v239
      %267 = vst.msk [vmem:[#allocation4 + $0xc8] sm:$0xff] %vm133, %v241
      %v268 = vlaneseq
      %v269 = vshrl.u32 %v268, 7
      %v270 = vsub.s32 0, %v269
      %v271 = vrot.slane %v105, %v270
      %v272 = vmul.f32 %v79, %v271
      %v273 = vmul.f32 %v80, %v271
      %v274 = vmul.f32 %v81, %v271
      %v275 = vmul.f32 %v82, %v271
      %v276 = vmul.f32 %v83, %v271
      %v277 = vmul.f32 %v84, %v271
      %v278 = vmul.f32 %v85, %v271
      %v279 = vmul.f32 %v86, %v271
      %v280 = vmul.f32 %v87, %v271
      %v281 = vmul.f32 %v88, %v271
      %v282 = vmul.f32 %v89, %v271
      %v283 = vmul.f32 %v90, %v271
      %v284 = vmul.f32 %v91, %v271
      %v285 = vmul.f32 %v92, %v271
      %v286 = vmul.f32 %v93, %v271
      %v287 = vmul.f32 %v94, %v271
      %v288 = vmul.f32 %v95, %v271
      %v289 = vmul.f32 %v96, %v271
      %v290 = vmul.f32 %v97, %v271
      %v291 = vmul.f32 %v98, %v271
      %v292 = vmul.f32 %v99, %v271
      %v293 = vmul.f32 %v100, %v271
      %v294 = vmul.f32 %v101, %v271
      %v295 = vmul.f32 %v102, %v271
      %v296 = vmul.f32 %v103, %v271
      %v297 = vmul.f32 %v104, %v271
      %v298 = vpack.c.bf16 %v273, %v272
      %v299 = vpack.c.bf16 %v275, %v274
      %v300 = vpack.c.bf16 %v277, %v276
      %v301 = vpack.c.bf16 %v279, %v278
      %v302 = vpack.c.bf16 %v281, %v280
      %v303 = vpack.c.bf16 %v283, %v282
      %v304 = vpack.c.bf16 %v285, %v284
      %v305 = vpack.c.bf16 %v287, %v286
      %v306 = vpack.c.bf16 %v289, %v288
      %v307 = vpack.c.bf16 %v291, %v290
      %v308 = vpack.c.bf16 %v293, %v292
      %v309 = vpack.c.bf16 %v295, %v294
      %v310 = vpack.c.bf16 %v297, %v296
      %311 = vst [vmem:[#allocation3] sm:$0xff] %v298
      %312 = vst [vmem:[#allocation3 + $0x8] sm:$0xff] %v299
      %313 = vst [vmem:[#allocation3 + $0x10] sm:$0xff] %v300
      %314 = vst [vmem:[#allocation3 + $0x18] sm:$0xff] %v301
      %315 = vst [vmem:[#allocation3 + $0x20] sm:$0xff] %v302
      %316 = vst [vmem:[#allocation3 + $0x28] sm:$0xff] %v303
      %317 = vst [vmem:[#allocation3 + $0x30] sm:$0xff] %v304
      %318 = vst [vmem:[#allocation3 + $0x38] sm:$0xff] %v305
      %319 = vst [vmem:[#allocation3 + $0x40] sm:$0xff] %v306
      %320 = vst [vmem:[#allocation3 + $0x48] sm:$0xff] %v307
      %321 = vst [vmem:[#allocation3 + $0x50] sm:$0xff] %v308
      %322 = vst [vmem:[#allocation3 + $0x58] sm:$0xff] %v309
      %323 = vst [vmem:[#allocation3 + $0x60] sm:$0xff] %v310
    $region41: #{tpu_custom_call.1} parent=1 // pred_fallthru
      _
    %v324 = vld [vmem:[#allocation12] ss:$8 sm:$0x3]
    %s325 = scalar_lea.vmem [#allocation12], 1
    %v326 = vld [vmem:[%s325] ss:$8 sm:$0x3]
    %s327 = scalar_lea.vmem [#allocation12], 2
    %v328 = vld [vmem:[%s327] ss:$8 sm:$0x3]
    %s329 = scalar_lea.vmem [#allocation12], 3
    %v330 = vld [vmem:[%s329] ss:$8 sm:$0x3]
    %s331 = scalar_lea.vmem [#allocation12], 4
    %v332 = vld [vmem:[%s331] ss:$8 sm:$0x3]
    %v333 = vld [vmem:[#allocation3] sm:$0xff]
    %v334 = vld [vmem:[#allocation3 + $0x8] sm:$0xff]
    %v335 = vld [vmem:[#allocation3 + $0x10] sm:$0xff]
    %v336 = vld [vmem:[#allocation3 + $0x18] sm:$0xff]
    %v337 = vld [vmem:[#allocation3 + $0x20] sm:$0xff]
    %v338 = vld [vmem:[#allocation3 + $0x28] sm:$0xff]
    %v339 = vld [vmem:[#allocation3 + $0x30] sm:$0xff]
    %v340 = vld [vmem:[#allocation3 + $0x38] sm:$0xff]
    %v341 = vld [vmem:[#allocation3 + $0x40] sm:$0xff]
    %v342 = vld [vmem:[#allocation3 + $0x48] sm:$0xff]
    %v343 = vld [vmem:[#allocation3 + $0x50] sm:$0xff]
    %v344 = vld [vmem:[#allocation3 + $0x58] sm:$0xff]
    %v345 = vld [vmem:[#allocation3 + $0x60] sm:$0xff]
    %v346 = vld [vmem:[#allocation9] sm:$0xff]
    %v347 = vld [vmem:[#allocation9 + $0x8] sm:$0xff]
    %v348 = vld [vmem:[#allocation9 + $0x10] sm:$0xff]
    %v349 = vld [vmem:[#allocation9 + $0x18] sm:$0xff]
    %v350 = vld [vmem:[#allocation9 + $0x20] sm:$0xff]
    %v351 = vld [vmem:[#allocation9 + $0x28] sm:$0xff]
    %v352 = vld [vmem:[#allocation9 + $0x30] sm:$0xff]
    %v353 = vld [vmem:[#allocation9 + $0x38] sm:$0xff]
    %v354 = vld [vmem:[#allocation9 + $0x40] sm:$0xff]
    %v355 = vld [vmem:[#allocation9 + $0x48] sm:$0xff]
    %v356 = vld [vmem:[#allocation9 + $0x50] sm:$0xff]
    %v357 = vld [vmem:[#allocation9 + $0x58] sm:$0xff]
    %v358 = vld [vmem:[#allocation9 + $0x60] sm:$0xff]
    %v359 = vld [vmem:[#allocation9 + $0x68] sm:$0xff]
    %v360 = vld [vmem:[#allocation9 + $0x70] sm:$0xff]
    %v361 = vld [vmem:[#allocation9 + $0x78] sm:$0xff]
    %v378 = vunpack.c.l.b16 %v346
    %v379 = vunpack.c.h.b16 %v346
    %v380 = vunpack.c.l.b16 %v347
    %v381 = vunpack.c.h.b16 %v347
    %v382 = vunpack.c.l.b16 %v348
    %v383 = vunpack.c.h.b16 %v348
    %v384 = vunpack.c.l.b16 %v349
    %v385 = vunpack.c.h.b16 %v349
    %v386 = vunpack.c.l.b16 %v350
    %v387 = vunpack.c.h.b16 %v350
    %v388 = vunpack.c.l.b16 %v351
    %v389 = vunpack.c.h.b16 %v351
    %v390 = vunpack.c.l.b16 %v352
    %v391 = vunpack.c.h.b16 %v352
    %v392 = vunpack.c.l.b16 %v353
    %v393 = vunpack.c.h.b16 %v353
    %v394 = vunpack.c.l.b16 %v354
    %v395 = vunpack.c.h.b16 %v354
    %v396 = vunpack.c.l.b16 %v355
    %v397 = vunpack.c.h.b16 %v355
    %v398 = vunpack.c.l.b16 %v356
    %v399 = vunpack.c.h.b16 %v356
    %v400 = vunpack.c.l.b16 %v357
    %v401 = vunpack.c.h.b16 %v357
    %v402 = vunpack.c.l.b16 %v358
    %v403 = vunpack.c.h.b16 %v358
    %v404 = vunpack.c.l.b16 %v359
    %v405 = vunpack.c.h.b16 %v359
    %v406 = vunpack.c.l.b16 %v360
    %v407 = vunpack.c.h.b16 %v360
    %v408 = vunpack.c.l.b16 %v361
    %v409 = vunpack.c.h.b16 %v361
    %v410 = vpack.c.b16 %v380, %v378
    %v411 = vpack.c.b16 %v381, %v379
    %v412 = vpack.c.b16 %v384, %v382
    %v413 = vpack.c.b16 %v385, %v383
    %v414 = vpack.c.b16 %v388, %v386
    %v415 = vpack.c.b16 %v389, %v387
    %v416 = vpack.c.b16 %v392, %v390
    %v417 = vpack.c.b16 %v393, %v391
    %v418 = vpack.c.b16 %v396, %v394
    %v419 = vpack.c.b16 %v397, %v395
    %v420 = vpack.c.b16 %v400, %v398
    %v421 = vpack.c.b16 %v401, %v399
    %v422 = vpack.c.b16 %v404, %v402
    %v423 = vpack.c.b16 %v405, %v403
    %v424 = vpack.c.b16 %v408, %v406
    %v425 = vpack.c.b16 %v409, %v407
    %442 = vmatprep.subr.bf16.mxu0 %v411
    %443 = vmatpush1.bf16.msra.mxu0 %v410
    %444 = vmatprep.subr.bf16.mxu0 %v413
    %445 = vmatpush1.bf16.msra.mxu0 %v412
    %446 = vmatprep.subr.bf16.mxu0 %v415
    %447 = vmatpush1.bf16.msra.mxu0 %v414
    %448 = vmatprep.subr.bf16.mxu0 %v417
    %449 = vmatpush1.bf16.msra.mxu0 %v416
    %450 = vmatprep.subr.bf16.mxu0 %v419
    %451 = vmatpush1.bf16.msra.mxu0 %v418
    %452 = vmatprep.subr.bf16.mxu0 %v421
    %453 = vmatpush1.bf16.msra.mxu0 %v420
    %454 = vmatprep.subr.bf16.mxu0 %v423
    %455 = vmatpush1.bf16.msra.mxu0 %v422
    %456 = vmatprep.subr.bf16.mxu0 %v425
    %457 = vmatpush1.bf16.msra.mxu0 %v424
    %458 = vmatprep.subr.bf16.mxu0 0
    %459 = vmatpush1.bf16.msra.mxu0 0
    %460 = vmatprep.subr.bf16.mxu0 0
    %461 = vmatpush1.bf16.msra.mxu0 0
    %462 = vmatprep.subr.bf16.mxu0 0
    %463 = vmatpush1.bf16.msra.mxu0 0
    %464 = vmatprep.subr.bf16.mxu0 0
    %465 = vmatpush1.bf16.msra.mxu0 0
    %466 = vmatprep.subr.bf16.mxu0 0
    %467 = vmatpush1.bf16.msra.mxu0 0
    %468 = vmatprep.subr.bf16.mxu0 0
    %469 = vmatpush1.bf16.msra.mxu0 0
    %470 = vmatprep.subr.bf16.mxu0 0
    %471 = vmatpush1.bf16.msra.mxu0 0
    %472 = vmatprep.subr.bf16.mxu0 0
    %473 = vmatpush1.bf16.msra.mxu0 0
    %474 = vmatprep.mubr.bf16.mxu0 0
    %475 = vmatmul.mubr.bf16.gmra.mrb[0].mxu0 %v333
    %v476 = vpop.f32.mrb[0].mxu0
    %v477 = vadd.f32 0.0, %v476
    %v478 = vpop.f32.mrb[0].mxu0
    %v479 = vadd.f32 0.0, %v478
    %v480 = vpop.f32.mrb[0].mxu0
    %v481 = vadd.f32 0.0, %v480
    %v482 = vpop.f32.mrb[0].mxu0
    %v483 = vadd.f32 0.0, %v482
    %484 = vmatprep.mubr.bf16.mxu0 0
    %485 = vmatmul.mubr.bf16.gmra.mrb[0].mxu0 %v334
    %v486 = vpop.f32.mrb[0].mxu0
    %v487 = vadd.f32 0.0, %v486
    %v488 = vpop.f32.mrb[0].mxu0
    %v489 = vadd.f32 0.0, %v488
    %v490 = vpop.f32.mrb[0].mxu0
    %v491 = vadd.f32 0.0, %v490
    %v492 = vpop.f32.mrb[0].mxu0
    %v493 = vadd.f32 0.0, %v492
    %494 = vmatprep.mubr.bf16.mxu0 0
    %495 = vmatmul.mubr.bf16.gmra.mrb[0].mxu0 %v335
    %v496 = vpop.f32.mrb[0].mxu0
    %v497 = vadd.f32 0.0, %v496
    %v498 = vpop.f32.mrb[0].mxu0
    %v499 = vadd.f32 0.0, %v498
    %v500 = vpop.f32.mrb[0].mxu0
    %v501 = vadd.f32 0.0, %v500
    %v502 = vpop.f32.mrb[0].mxu0
    %v503 = vadd.f32 0.0, %v502
    %504 = vmatprep.mubr.bf16.mxu0 0
    %505 = vmatmul.mubr.bf16.gmra.mrb[0].mxu0 %v336
    %v506 = vpop.f32.mrb[0].mxu0
    %v507 = vadd.f32 0.0, %v506
    %v508 = vpop.f32.mrb[0].mxu0
    %v509 = vadd.f32 0.0, %v508
    %v510 = vpop.f32.mrb[0].mxu0
    %v511 = vadd.f32 0.0, %v510
    %v512 = vpop.f32.mrb[0].mxu0
    %v513 = vadd.f32 0.0, %v512
    %514 = vmatprep.mubr.bf16.mxu0 0
    %515 = vmatmul.mubr.bf16.gmra.mrb[0].mxu0 %v337
    %v516 = vpop.f32.mrb[0].mxu0
    %v517 = vadd.f32 0.0, %v516
    %v518 = vpop.f32.mrb[0].mxu0
    %v519 = vadd.f32 0.0, %v518
    %v520 = vpop.f32.mrb[0].mxu0
    %v521 = vadd.f32 0.0, %v520
    %v522 = vpop.f32.mrb[0].mxu0
    %v523 = vadd.f32 0.0, %v522
    %524 = vmatprep.mubr.bf16.mxu0 0
    %525 = vmatmul.mubr.bf16.gmra.mrb[0].mxu0 %v338
    %v526 = vpop.f32.mrb[0].mxu0
    %v527 = vadd.f32 0.0, %v526
    %v528 = vpop.f32.mrb[0].mxu0
    %v529 = vadd.f32 0.0, %v528
    %v530 = vpop.f32.mrb[0].mxu0
    %v531 = vadd.f32 0.0, %v530
    %v532 = vpop.f32.mrb[0].mxu0
    %v533 = vadd.f32 0.0, %v532
    %534 = vmatprep.mubr.bf16.mxu0 0
    %535 = vmatmul.mubr.bf16.gmra.mrb[0].mxu0 %v339
    %v536 = vpop.f32.mrb[0].mxu0
    %v537 = vadd.f32 0.0, %v536
    %v538 = vpop.f32.mrb[0].mxu0
    %v539 = vadd.f32 0.0, %v538
    %v540 = vpop.f32.mrb[0].mxu0
    %v541 = vadd.f32 0.0, %v540
    %v542 = vpop.f32.mrb[0].mxu0
    %v543 = vadd.f32 0.0, %v542
    %544 = vmatprep.mubr.bf16.mxu0 0
    %545 = vmatmul.mubr.bf16.gmra.mrb[0].mxu0 %v340
    %v546 = vpop.f32.mrb[0].mxu0
    %v547 = vadd.f32 0.0, %v546
    %v548 = vpop.f32.mrb[0].mxu0
    %v549 = vadd.f32 0.0, %v548
    %v550 = vpop.f32.mrb[0].mxu0
    %v551 = vadd.f32 0.0, %v550
    %v552 = vpop.f32.mrb[0].mxu0
    %v553 = vadd.f32 0.0, %v552
    %554 = vmatprep.mubr.bf16.mxu0 0
    %555 = vmatmul.mubr.bf16.gmra.mrb[0].mxu0 %v341
    %v556 = vpop.f32.mrb[0].mxu0
    %v557 = vadd.f32 0.0, %v556
    %v558 = vpop.f32.mrb[0].mxu0
    %v559 = vadd.f32 0.0, %v558
    %v560 = vpop.f32.mrb[0].mxu0
    %v561 = vadd.f32 0.0, %v560
    %v562 = vpop.f32.mrb[0].mxu0
    %v563 = vadd.f32 0.0, %v562
    %564 = vmatprep.mubr.bf16.mxu0 0
    %565 = vmatmul.mubr.bf16.gmra.mrb[0].mxu0 %v342
    %v566 = vpop.f32.mrb[0].mxu0
    %v567 = vadd.f32 0.0, %v566
    %v568 = vpop.f32.mrb[0].mxu0
    %v569 = vadd.f32 0.0, %v568
    %v570 = vpop.f32.mrb[0].mxu0
    %v571 = vadd.f32 0.0, %v570
    %v572 = vpop.f32.mrb[0].mxu0
    %v573 = vadd.f32 0.0, %v572
    %574 = vmatprep.mubr.bf16.mxu0 0
    %575 = vmatmul.mubr.bf16.gmra.mrb[0].mxu0 %v343
    %v576 = vpop.f32.mrb[0].mxu0
    %v577 = vadd.f32 0.0, %v576
    %v578 = vpop.f32.mrb[0].mxu0
    %v579 = vadd.f32 0.0, %v578
    %v580 = vpop.f32.mrb[0].mxu0
    %v581 = vadd.f32 0.0, %v580
    %v582 = vpop.f32.mrb[0].mxu0
    %v583 = vadd.f32 0.0, %v582
    %584 = vmatprep.mubr.bf16.mxu0 0
    %585 = vmatmul.mubr.bf16.gmra.mrb[0].mxu0 %v344
    %v586 = vpop.f32.mrb[0].mxu0
    %v587 = vadd.f32 0.0, %v586
    %v588 = vpop.f32.mrb[0].mxu0
    %v589 = vadd.f32 0.0, %v588
    %v590 = vpop.f32.mrb[0].mxu0
    %v591 = vadd.f32 0.0, %v590
    %v592 = vpop.f32.mrb[0].mxu0
    %v593 = vadd.f32 0.0, %v592
    %594 = vmatprep.mubr.bf16.mxu0 0
    %595 = vmatmul.mubr.bf16.gmra.mrb[0].mxu0 %v345
    %v596 = vpop.f32.mrb[0].mxu0
    %v597 = vadd.f32 0.0, %v596
    %v598 = vpop.f32.mrb[0].mxu0
    %v599 = vadd.f32 0.0, %v598
    %v600 = vpop.f32.mrb[0].mxu0
    %v601 = vadd.f32 0.0, %v600
    %v602 = vpop.f32.mrb[0].mxu0
    %v603 = vadd.f32 0.0, %v602
    %604 = vdwg.mxu0
    %v606 = vlaneseq
    %v607 = vshrl.u32 %v606, 7
    %v608 = vsub.s32 0, %v607
    %v609 = vrot.slane %v324, %v608
    %v610 = vlaneseq
    %v611 = vshrl.u32 %v610, 7
    %v612 = vsub.s32 1, %v611
    %v613 = vrot.slane %v324, %v612
    %v616 = vmul.f32 %v477, %v609
    %v617 = vmul.f32 %v479, %v613
    %v618 = vmul.f32 %v481, %v609
    %v619 = vmul.f32 %v483, %v613
    %v620 = vmul.f32 %v487, %v609
    %v621 = vmul.f32 %v489, %v613
    %v622 = vmul.f32 %v491, %v609
    %v623 = vmul.f32 %v493, %v613
    %v624 = vmul.f32 %v497, %v609
    %v625 = vmul.f32 %v499, %v613
    %v626 = vmul.f32 %v501, %v609
    %v627 = vmul.f32 %v503, %v613
    %v628 = vmul.f32 %v507, %v609
    %v629 = vmul.f32 %v509, %v613
    %v630 = vmul.f32 %v511, %v609
    %v631 = vmul.f32 %v513, %v613
    %v632 = vmul.f32 %v517, %v609
    %v633 = vmul.f32 %v519, %v613
    %v634 = vmul.f32 %v521, %v609
    %v635 = vmul.f32 %v523, %v613
    %v636 = vmul.f32 %v527, %v609
    %v637 = vmul.f32 %v529, %v613
    %v638 = vmul.f32 %v531, %v609
    %v639 = vmul.f32 %v533, %v613
    %v640 = vmul.f32 %v537, %v609
    %v641 = vmul.f32 %v539, %v613
    %v642 = vmul.f32 %v541, %v609
    %v643 = vmul.f32 %v543, %v613
    %v644 = vmul.f32 %v547, %v609
    %v645 = vmul.f32 %v549, %v613
    %v646 = vmul.f32 %v551, %v609
    %v647 = vmul.f32 %v553, %v613
    %v648 = vmul.f32 %v557, %v609
    %v649 = vmul.f32 %v559, %v613
    %v650 = vmul.f32 %v561, %v609
    %v651 = vmul.f32 %v563, %v613
    %v652 = vmul.f32 %v567, %v609
    %v653 = vmul.f32 %v569, %v613
    %v654 = vmul.f32 %v571, %v609
    %v655 = vmul.f32 %v573, %v613
    %v656 = vmul.f32 %v577, %v609
    %v657 = vmul.f32 %v579, %v613
    %v658 = vmul.f32 %v581, %v609
    %v659 = vmul.f32 %v583, %v613
    %v660 = vmul.f32 %v587, %v609
    %v661 = vmul.f32 %v589, %v613
    %v662 = vmul.f32 %v591, %v609
    %v663 = vmul.f32 %v593, %v613
    %v664 = vmul.f32 %v597, %v609
    %v665 = vmul.f32 %v599, %v613
    %v666 = vmul.f32 %v601, %v609
    %v667 = vmul.f32 %v603, %v613
    %v668 = vld [vmem:[#allocation4] sm:$0xff]
    %v669 = vld [vmem:[#allocation4 + $0x8] sm:$0xff]
    %v670 = vld [vmem:[#allocation4 + $0x10] sm:$0xff]
    %v671 = vld [vmem:[#allocation4 + $0x18] sm:$0xff]
    %v672 = vld [vmem:[#allocation4 + $0x20] sm:$0xff]
    %v673 = vld [vmem:[#allocation4 + $0x28] sm:$0xff]
    %v674 = vld [vmem:[#allocation4 + $0x30] sm:$0xff]
    %v675 = vld [vmem:[#allocation4 + $0x38] sm:$0xff]
    %v676 = vld [vmem:[#allocation4 + $0x40] sm:$0xff]
    %v677 = vld [vmem:[#allocation4 + $0x48] sm:$0xff]
    %v678 = vld [vmem:[#allocation4 + $0x50] sm:$0xff]
    %v679 = vld [vmem:[#allocation4 + $0x58] sm:$0xff]
    %v680 = vld [vmem:[#allocation4 + $0x60] sm:$0xff]
    %v681 = vld [vmem:[#allocation4 + $0x68] sm:$0xff]
    %v682 = vld [vmem:[#allocation4 + $0x70] sm:$0xff]
    %v683 = vld [vmem:[#allocation4 + $0x78] sm:$0xff]
    %v684 = vld [vmem:[#allocation4 + $0x80] sm:$0xff]
    %v685 = vld [vmem:[#allocation4 + $0x88] sm:$0xff]
    %v686 = vld [vmem:[#allocation4 + $0x90] sm:$0xff]
    %v687 = vld [vmem:[#allocation4 + $0x98] sm:$0xff]
    %v688 = vld [vmem:[#allocation4 + $0xa0] sm:$0xff]
    %v689 = vld [vmem:[#allocation4 + $0xa8] sm:$0xff]
    %v690 = vld [vmem:[#allocation4 + $0xb0] sm:$0xff]
    %v691 = vld [vmem:[#allocation4 + $0xb8] sm:$0xff]
    %v692 = vld [vmem:[#allocation4 + $0xc0] sm:$0xff]
    %v693 = vld [vmem:[#allocation4 + $0xc8] sm:$0xff]
    %695 = vset.pattern.permute.xlu0 0
    %696 = vperm.xlu0 %695, %v668
    %v697 = vpop.permute.xlu0 %696
    %700 = vset.pattern.permute.xlu0 0
    %701 = vperm.xlu0 %700, %v669
    %v702 = vpop.permute.xlu0 %701
    %705 = vset.pattern.permute.xlu0 0
    %706 = vperm.xlu0 %705, %v670
    %v707 = vpop.permute.xlu0 %706
    %710 = vset.pattern.permute.xlu0 0
    %711 = vperm.xlu0 %710, %v671
    %v712 = vpop.permute.xlu0 %711
    %715 = vset.pattern.permute.xlu0 0
    %716 = vperm.xlu0 %715, %v672
    %v717 = vpop.permute.xlu0 %716
    %720 = vset.pattern.permute.xlu0 0
    %721 = vperm.xlu0 %720, %v673
    %v722 = vpop.permute.xlu0 %721
    %725 = vset.pattern.permute.xlu0 0
    %726 = vperm.xlu0 %725, %v674
    %v727 = vpop.permute.xlu0 %726
    %730 = vset.pattern.permute.xlu0 0
    %731 = vperm.xlu0 %730, %v675
    %v732 = vpop.permute.xlu0 %731
    %735 = vset.pattern.permute.xlu0 0
    %736 = vperm.xlu0 %735, %v676
    %v737 = vpop.permute.xlu0 %736
    %740 = vset.pattern.permute.xlu0 0
    %741 = vperm.xlu0 %740, %v677
    %v742 = vpop.permute.xlu0 %741
    %745 = vset.pattern.permute.xlu0 0
    %746 = vperm.xlu0 %745, %v678
    %v747 = vpop.permute.xlu0 %746
    %750 = vset.pattern.permute.xlu0 0
    %751 = vperm.xlu0 %750, %v679
    %v752 = vpop.permute.xlu0 %751
    %755 = vset.pattern.permute.xlu0 0
    %756 = vperm.xlu0 %755, %v680
    %v757 = vpop.permute.xlu0 %756
    %760 = vset.pattern.permute.xlu0 0
    %761 = vperm.xlu0 %760, %v681
    %v762 = vpop.permute.xlu0 %761
    %765 = vset.pattern.permute.xlu0 0
    %766 = vperm.xlu0 %765, %v682
    %v767 = vpop.permute.xlu0 %766
    %770 = vset.pattern.permute.xlu0 0
    %771 = vperm.xlu0 %770, %v683
    %v772 = vpop.permute.xlu0 %771
    %775 = vset.pattern.permute.xlu0 0
    %776 = vperm.xlu0 %775, %v684
    %v777 = vpop.permute.xlu0 %776
    %780 = vset.pattern.permute.xlu0 0
    %781 = vperm.xlu0 %780, %v685
    %v782 = vpop.permute.xlu0 %781
    %785 = vset.pattern.permute.xlu0 0
    %786 = vperm.xlu0 %785, %v686
    %v787 = vpop.permute.xlu0 %786
    %790 = vset.pattern.permute.xlu0 0
    %791 = vperm.xlu0 %790, %v687
    %v792 = vpop.permute.xlu0 %791
    %795 = vset.pattern.permute.xlu0 0
    %796 = vperm.xlu0 %795, %v688
    %v797 = vpop.permute.xlu0 %796
    %800 = vset.pattern.permute.xlu0 0
    %801 = vperm.xlu0 %800, %v689
    %v802 = vpop.permute.xlu0 %801
    %805 = vset.pattern.permute.xlu0 0
    %806 = vperm.xlu0 %805, %v690
    %v807 = vpop.permute.xlu0 %806
    %810 = vset.pattern.permute.xlu0 0
    %811 = vperm.xlu0 %810, %v691
    %v812 = vpop.permute.xlu0 %811
    %815 = vset.pattern.permute.xlu0 0
    %816 = vperm.xlu0 %815, %v692
    %v817 = vpop.permute.xlu0 %816
    %820 = vset.pattern.permute.xlu0 0
    %821 = vperm.xlu0 %820, %v693
    %v822 = vpop.permute.xlu0 %821
    %v825 = vlaneseq
    %v826 = vshrl.u32 %v825, 7
    %v827 = vsub.s32 0, %v826
    %v828 = vrot.slane %v326, %v827
    %v829 = vlaneseq
    %v830 = vshrl.u32 %v829, 7
    %v831 = vsub.s32 1, %v830
    %v832 = vrot.slane %v326, %v831
    %v835 = vmul.f32 %v697, %v828
    %v836 = vmul.f32 %v697, %v832
    %v837 = vmul.f32 %v702, %v828
    %v838 = vmul.f32 %v702, %v832
    %v839 = vmul.f32 %v707, %v828
    %v840 = vmul.f32 %v707, %v832
    %v841 = vmul.f32 %v712, %v828
    %v842 = vmul.f32 %v712, %v832
    %v843 = vmul.f32 %v717, %v828
    %v844 = vmul.f32 %v717, %v832
    %v845 = vmul.f32 %v722, %v828
    %v846 = vmul.f32 %v722, %v832
    %v847 = vmul.f32 %v727, %v828
    %v848 = vmul.f32 %v727, %v832
    %v849 = vmul.f32 %v732, %v828
    %v850 = vmul.f32 %v732, %v832
    %v851 = vmul.f32 %v737, %v828
    %v852 = vmul.f32 %v737, %v832
    %v853 = vmul.f32 %v742, %v828
    %v854 = vmul.f32 %v742, %v832
    %v855 = vmul.f32 %v747, %v828
    %v856 = vmul.f32 %v747, %v832
    %v857 = vmul.f32 %v752, %v828
    %v858 = vmul.f32 %v752, %v832
    %v859 = vmul.f32 %v757, %v828
    %v860 = vmul.f32 %v757, %v832
    %v861 = vmul.f32 %v762, %v828
    %v862 = vmul.f32 %v762, %v832
    %v863 = vmul.f32 %v767, %v828
    %v864 = vmul.f32 %v767, %v832
    %v865 = vmul.f32 %v772, %v828
    %v866 = vmul.f32 %v772, %v832
    %v867 = vmul.f32 %v777, %v828
    %v868 = vmul.f32 %v777, %v832
    %v869 = vmul.f32 %v782, %v828
    %v870 = vmul.f32 %v782, %v832
    %v871 = vmul.f32 %v787, %v828
    %v872 = vmul.f32 %v787, %v832
    %v873 = vmul.f32 %v792, %v828
    %v874 = vmul.f32 %v792, %v832
    %v875 = vmul.f32 %v797, %v828
    %v876 = vmul.f32 %v797, %v832
    %v877 = vmul.f32 %v802, %v828
    %v878 = vmul.f32 %v802, %v832
    %v879 = vmul.f32 %v807, %v828
    %v880 = vmul.f32 %v807, %v832
    %v881 = vmul.f32 %v812, %v828
    %v882 = vmul.f32 %v812, %v832
    %v883 = vmul.f32 %v817, %v828
    %v884 = vmul.f32 %v817, %v832
    %v885 = vmul.f32 %v822, %v828
    %v886 = vmul.f32 %v822, %v832
    %v887 = vadd.f32 %v616, %v835
    %v888 = vadd.f32 %v617, %v836
    %v889 = vadd.f32 %v618, %v837
    %v890 = vadd.f32 %v619, %v838
    %v891 = vadd.f32 %v620, %v839
    %v892 = vadd.f32 %v621, %v840
    %v893 = vadd.f32 %v622, %v841
    %v894 = vadd.f32 %v623, %v842
    %v895 = vadd.f32 %v624, %v843
    %v896 = vadd.f32 %v625, %v844
    %v897 = vadd.f32 %v626, %v845
    %v898 = vadd.f32 %v627, %v846
    %v899 = vadd.f32 %v628, %v847
    %v900 = vadd.f32 %v629, %v848
    %v901 = vadd.f32 %v630, %v849
    %v902 = vadd.f32 %v631, %v850
    %v903 = vadd.f32 %v632, %v851
    %v904 = vadd.f32 %v633, %v852
    %v905 = vadd.f32 %v634, %v853
    %v906 = vadd.f32 %v635, %v854
    %v907 = vadd.f32 %v636, %v855
    %v908 = vadd.f32 %v637, %v856
    %v909 = vadd.f32 %v638, %v857
    %v910 = vadd.f32 %v639, %v858
    %v911 = vadd.f32 %v640, %v859
    %v912 = vadd.f32 %v641, %v860
    %v913 = vadd.f32 %v642, %v861
    %v914 = vadd.f32 %v643, %v862
    %v915 = vadd.f32 %v644, %v863
    %v916 = vadd.f32 %v645, %v864
    %v917 = vadd.f32 %v646, %v865
    %v918 = vadd.f32 %v647, %v866
    %v919 = vadd.f32 %v648, %v867
    %v920 = vadd.f32 %v649, %v868
    %v921 = vadd.f32 %v650, %v869
    %v922 = vadd.f32 %v651, %v870
    %v923 = vadd.f32 %v652, %v871
    %v924 = vadd.f32 %v653, %v872
    %v925 = vadd.f32 %v654, %v873
    %v926 = vadd.f32 %v655, %v874
    %v927 = vadd.f32 %v656, %v875
    %v928 = vadd.f32 %v657, %v876
    %v929 = vadd.f32 %v658, %v877
    %v930 = vadd.f32 %v659, %v878
    %v931 = vadd.f32 %v660, %v879
    %v932 = vadd.f32 %v661, %v880
    %v933 = vadd.f32 %v662, %v881
    %v934 = vadd.f32 %v663, %v882
    %v935 = vadd.f32 %v664, %v883
    %v936 = vadd.f32 %v665, %v884
    %v937 = vadd.f32 %v666, %v885
    %v938 = vadd.f32 %v667, %v886
    %v940 = vlaneseq
    %v941 = vshrl.u32 %v940, 7
    %v942 = vsub.s32 0, %v941
    %v943 = vrot.slane %v328, %v942
    %v944 = vlaneseq
    %v945 = vshrl.u32 %v944, 7
    %v946 = vsub.s32 1, %v945
    %v947 = vrot.slane %v328, %v946
    %v950 = vadd.f32 %v887, %v943
    %v951 = vadd.f32 %v888, %v947
    %v952 = vadd.f32 %v889, %v943
    %v953 = vadd.f32 %v890, %v947
    %v954 = vadd.f32 %v891, %v943
    %v955 = vadd.f32 %v892, %v947
    %v956 = vadd.f32 %v893, %v943
    %v957 = vadd.f32 %v894, %v947
    %v958 = vadd.f32 %v895, %v943
    %v959 = vadd.f32 %v896, %v947
    %v960 = vadd.f32 %v897, %v943
    %v961 = vadd.f32 %v898, %v947
    %v962 = vadd.f32 %v899, %v943
    %v963 = vadd.f32 %v900, %v947
    %v964 = vadd.f32 %v901, %v943
    %v965 = vadd.f32 %v902, %v947
    %v966 = vadd.f32 %v903, %v943
    %v967 = vadd.f32 %v904, %v947
    %v968 = vadd.f32 %v905, %v943
    %v969 = vadd.f32 %v906, %v947
    %v970 = vadd.f32 %v907, %v943
    %v971 = vadd.f32 %v908, %v947
    %v972 = vadd.f32 %v909, %v943
    %v973 = vadd.f32 %v910, %v947
    %v974 = vadd.f32 %v911, %v943
    %v975 = vadd.f32 %v912, %v947
    %v976 = vadd.f32 %v913, %v943
    %v977 = vadd.f32 %v914, %v947
    %v978 = vadd.f32 %v915, %v943
    %v979 = vadd.f32 %v916, %v947
    %v980 = vadd.f32 %v917, %v943
    %v981 = vadd.f32 %v918, %v947
    %v982 = vadd.f32 %v919, %v943
    %v983 = vadd.f32 %v920, %v947
    %v984 = vadd.f32 %v921, %v943
    %v985 = vadd.f32 %v922, %v947
    %v986 = vadd.f32 %v923, %v943
    %v987 = vadd.f32 %v924, %v947
    %v988 = vadd.f32 %v925, %v943
    %v989 = vadd.f32 %v926, %v947
    %v990 = vadd.f32 %v927, %v943
    %v991 = vadd.f32 %v928, %v947
    %v992 = vadd.f32 %v929, %v943
    %v993 = vadd.f32 %v930, %v947
    %v994 = vadd.f32 %v931, %v943
    %v995 = vadd.f32 %v932, %v947
    %v996 = vadd.f32 %v933, %v943
    %v997 = vadd.f32 %v934, %v947
    %v998 = vadd.f32 %v935, %v943
    %v999 = vadd.f32 %v936, %v947
    %v1000 = vadd.f32 %v937, %v943
    %v1001 = vadd.f32 %v938, %v947
    %v1002 = vmax.f32 %v950, 0.0
    %v1003 = vmax.f32 %v951, 0.0
    %v1004 = vmax.f32 %v952, 0.0
    %v1005 = vmax.f32 %v953, 0.0
    %v1006 = vmax.f32 %v954, 0.0
    %v1007 = vmax.f32 %v955, 0.0
    %v1008 = vmax.f32 %v956, 0.0
    %v1009 = vmax.f32 %v957, 0.0
    %v1010 = vmax.f32 %v958, 0.0
    %v1011 = vmax.f32 %v959, 0.0
    %v1012 = vmax.f32 %v960, 0.0
    %v1013 = vmax.f32 %v961, 0.0
    %v1014 = vmax.f32 %v962, 0.0
    %v1015 = vmax.f32 %v963, 0.0
    %v1016 = vmax.f32 %v964, 0.0
    %v1017 = vmax.f32 %v965, 0.0
    %v1018 = vmax.f32 %v966, 0.0
    %v1019 = vmax.f32 %v967, 0.0
    %v1020 = vmax.f32 %v968, 0.0
    %v1021 = vmax.f32 %v969, 0.0
    %v1022 = vmax.f32 %v970, 0.0
    %v1023 = vmax.f32 %v971, 0.0
    %v1024 = vmax.f32 %v972, 0.0
    %v1025 = vmax.f32 %v973, 0.0
    %v1026 = vmax.f32 %v974, 0.0
    %v1027 = vmax.f32 %v975, 0.0
    %v1028 = vmax.f32 %v976, 0.0
    %v1029 = vmax.f32 %v977, 0.0
    %v1030 = vmax.f32 %v978, 0.0
    %v1031 = vmax.f32 %v979, 0.0
    %v1032 = vmax.f32 %v980, 0.0
    %v1033 = vmax.f32 %v981, 0.0
    %v1034 = vmax.f32 %v982, 0.0
    %v1035 = vmax.f32 %v983, 0.0
    %v1036 = vmax.f32 %v984, 0.0
    %v1037 = vmax.f32 %v985, 0.0
    %v1038 = vmax.f32 %v986, 0.0
    %v1039 = vmax.f32 %v987, 0.0
    %v1040 = vmax.f32 %v988, 0.0
    %v1041 = vmax.f32 %v989, 0.0
    %v1042 = vmax.f32 %v990, 0.0
    %v1043 = vmax.f32 %v991, 0.0
    %v1044 = vmax.f32 %v992, 0.0
    %v1045 = vmax.f32 %v993, 0.0
    %v1046 = vmax.f32 %v994, 0.0
    %v1047 = vmax.f32 %v995, 0.0
    %v1048 = vmax.f32 %v996, 0.0
    %v1049 = vmax.f32 %v997, 0.0
    %v1050 = vmax.f32 %v998, 0.0
    %v1051 = vmax.f32 %v999, 0.0
    %v1052 = vmax.f32 %v1000, 0.0
    %v1053 = vmax.f32 %v1001, 0.0
    %v1055 = vlaneseq
    %v1056 = vshrl.u32 %v1055, 7
    %v1057 = vsub.s32 0, %v1056
    %v1058 = vrot.slane %v330, %v1057
    %v1059 = vlaneseq
    %v1060 = vshrl.u32 %v1059, 7
    %v1061 = vsub.s32 1, %v1060
    %v1062 = vrot.slane %v330, %v1061
    %v1065 = vmul.f32 %v1002, %v1058
    %v1066 = vmul.f32 %v1003, %v1062
    %v1067 = vmul.f32 %v1004, %v1058
    %v1068 = vmul.f32 %v1005, %v1062
    %v1069 = vmul.f32 %v1006, %v1058
    %v1070 = vmul.f32 %v1007, %v1062
    %v1071 = vmul.f32 %v1008, %v1058
    %v1072 = vmul.f32 %v1009, %v1062
    %v1073 = vmul.f32 %v1010, %v1058
    %v1074 = vmul.f32 %v1011, %v1062
    %v1075 = vmul.f32 %v1012, %v1058
    %v1076 = vmul.f32 %v1013, %v1062
    %v1077 = vmul.f32 %v1014, %v1058
    %v1078 = vmul.f32 %v1015, %v1062
    %v1079 = vmul.f32 %v1016, %v1058
    %v1080 = vmul.f32 %v1017, %v1062
    %v1081 = vmul.f32 %v1018, %v1058
    %v1082 = vmul.f32 %v1019, %v1062
    %v1083 = vmul.f32 %v1020, %v1058
    %v1084 = vmul.f32 %v1021, %v1062
    %v1085 = vmul.f32 %v1022, %v1058
    %v1086 = vmul.f32 %v1023, %v1062
    %v1087 = vmul.f32 %v1024, %v1058
    %v1088 = vmul.f32 %v1025, %v1062
    %v1089 = vmul.f32 %v1026, %v1058
    %v1090 = vmul.f32 %v1027, %v1062
    %v1091 = vmul.f32 %v1028, %v1058
    %v1092 = vmul.f32 %v1029, %v1062
    %v1093 = vmul.f32 %v1030, %v1058
    %v1094 = vmul.f32 %v1031, %v1062
    %v1095 = vmul.f32 %v1032, %v1058
    %v1096 = vmul.f32 %v1033, %v1062
    %v1097 = vmul.f32 %v1034, %v1058
    %v1098 = vmul.f32 %v1035, %v1062
    %v1099 = vmul.f32 %v1036, %v1058
    %v1100 = vmul.f32 %v1037, %v1062
    %v1101 = vmul.f32 %v1038, %v1058
    %v1102 = vmul.f32 %v1039, %v1062
    %v1103 = vmul.f32 %v1040, %v1058
    %v1104 = vmul.f32 %v1041, %v1062
    %v1105 = vmul.f32 %v1042, %v1058
    %v1106 = vmul.f32 %v1043, %v1062
    %v1107 = vmul.f32 %v1044, %v1058
    %v1108 = vmul.f32 %v1045, %v1062
    %v1109 = vmul.f32 %v1046, %v1058
    %v1110 = vmul.f32 %v1047, %v1062
    %v1111 = vmul.f32 %v1048, %v1058
    %v1112 = vmul.f32 %v1049, %v1062
    %v1113 = vmul.f32 %v1050, %v1058
    %v1114 = vmul.f32 %v1051, %v1062
    %v1115 = vmul.f32 %v1052, %v1058
    %v1116 = vmul.f32 %v1053, %v1062
    %v1117 = vpack.c.bf16 %v1067, %v1065
    %v1118 = vpack.c.bf16 %v1068, %v1066
    %v1119 = vpack.c.bf16 %v1071, %v1069
    %v1120 = vpack.c.bf16 %v1072, %v1070
    %v1121 = vpack.c.bf16 %v1075, %v1073
    %v1122 = vpack.c.bf16 %v1076, %v1074
    %v1123 = vpack.c.bf16 %v1079, %v1077
    %v1124 = vpack.c.bf16 %v1080, %v1078
    %v1125 = vpack.c.bf16 %v1083, %v1081
    %v1126 = vpack.c.bf16 %v1084, %v1082
    %v1127 = vpack.c.bf16 %v1087, %v1085
    %v1128 = vpack.c.bf16 %v1088, %v1086
    %v1129 = vpack.c.bf16 %v1091, %v1089
    %v1130 = vpack.c.bf16 %v1092, %v1090
    %v1131 = vpack.c.bf16 %v1095, %v1093
    %v1132 = vpack.c.bf16 %v1096, %v1094
    %v1133 = vpack.c.bf16 %v1099, %v1097
    %v1134 = vpack.c.bf16 %v1100, %v1098
    %v1135 = vpack.c.bf16 %v1103, %v1101
    %v1136 = vpack.c.bf16 %v1104, %v1102
    %v1137 = vpack.c.bf16 %v1107, %v1105
    %v1138 = vpack.c.bf16 %v1108, %v1106
    %v1139 = vpack.c.bf16 %v1111, %v1109
    %v1140 = vpack.c.bf16 %v1112, %v1110
    %v1141 = vpack.c.bf16 %v1115, %v1113
    %v1142 = vpack.c.bf16 %v1116, %v1114
    %v1143 = vld [vmem:[#allocation2] sm:$0xff]
    %v1144 = vld [vmem:[#allocation2 + $0x8] sm:$0xff]
    %v1145 = vld [vmem:[#allocation2 + $0x10] sm:$0xff]
    %v1146 = vld [vmem:[#allocation2 + $0x18] sm:$0xff]
    %v1147 = vld [vmem:[#allocation2 + $0x20] sm:$0xff]
    %v1148 = vld [vmem:[#allocation2 + $0x28] sm:$0xff]
    %v1149 = vld [vmem:[#allocation2 + $0x30] sm:$0xff]
    %v1150 = vld [vmem:[#allocation2 + $0x38] sm:$0xff]
    %v1151 = vld [vmem:[#allocation2 + $0x40] sm:$0xff]
    %v1152 = vld [vmem:[#allocation2 + $0x48] sm:$0xff]
    %v1153 = vld [vmem:[#allocation2 + $0x50] sm:$0xff]
    %v1154 = vld [vmem:[#allocation2 + $0x58] sm:$0xff]
    %v1155 = vld [vmem:[#allocation2 + $0x60] sm:$0xff]
    %v1156 = vld [vmem:[#allocation2 + $0x68] sm:$0xff]
    %v1157 = vld [vmem:[#allocation2 + $0x70] sm:$0xff]
    %v1158 = vld [vmem:[#allocation2 + $0x78] sm:$0xff]
    %v1159 = vld [vmem:[#allocation2 + $0x80] sm:$0xff]
    %v1160 = vld [vmem:[#allocation2 + $0x88] sm:$0xff]
    %v1161 = vld [vmem:[#allocation2 + $0x90] sm:$0xff]
    %v1162 = vld [vmem:[#allocation2 + $0x98] sm:$0xff]
    %v1163 = vld [vmem:[#allocation2 + $0xa0] sm:$0xff]
    %v1164 = vld [vmem:[#allocation2 + $0xa8] sm:$0xff]
    %v1165 = vld [vmem:[#allocation2 + $0xb0] sm:$0xff]
    %v1166 = vld [vmem:[#allocation2 + $0xb8] sm:$0xff]
    %v1167 = vld [vmem:[#allocation2 + $0xc0] sm:$0xff]
    %v1168 = vld [vmem:[#allocation2 + $0xc8] sm:$0xff]
    %v1169 = vld [vmem:[#allocation11] sm:$0xf]
    %v1170 = vld [vmem:[#allocation11 + $0x4] sm:$0xf]
    %v1171 = vld [vmem:[#allocation11 + $0x8] sm:$0xf]
    %v1172 = vld [vmem:[#allocation11 + $0xc] sm:$0xf]
    %v1173 = vld [vmem:[#allocation11 + $0x10] sm:$0xf]
    %v1174 = vld [vmem:[#allocation11 + $0x14] sm:$0xf]
    %v1175 = vld [vmem:[#allocation11 + $0x18] sm:$0xf]
    %v1176 = vld [vmem:[#allocation11 + $0x1c] sm:$0xf]
    %v1177 = vld [vmem:[#allocation11 + $0x20] sm:$0xf]
    %v1178 = vld [vmem:[#allocation11 + $0x24] sm:$0xf]
    %v1179 = vld [vmem:[#allocation11 + $0x28] sm:$0xf]
    %v1180 = vld [vmem:[#allocation11 + $0x2c] sm:$0xf]
    %v1181 = vld [vmem:[#allocation11 + $0x30] sm:$0xf]
    %v1182 = vld [vmem:[#allocation11 + $0x34] sm:$0xf]
    %v1183 = vld [vmem:[#allocation11 + $0x38] sm:$0xf]
    %v1184 = vld [vmem:[#allocation11 + $0x3c] sm:$0xf]
    %v1185 = vld [vmem:[#allocation11 + $0x40] sm:$0xf]
    %v1186 = vld [vmem:[#allocation11 + $0x44] sm:$0xf]
    %v1187 = vld [vmem:[#allocation11 + $0x48] sm:$0xf]
    %v1188 = vld [vmem:[#allocation11 + $0x4c] sm:$0xf]
    %v1189 = vld [vmem:[#allocation11 + $0x50] sm:$0xf]
    %v1190 = vld [vmem:[#allocation11 + $0x54] sm:$0xf]
    %v1191 = vld [vmem:[#allocation11 + $0x58] sm:$0xf]
    %v1192 = vld [vmem:[#allocation11 + $0x5c] sm:$0xf]
    %v1193 = vld [vmem:[#allocation11 + $0x60] sm:$0xf]
    %v1194 = vld [vmem:[#allocation11 + $0x64] sm:$0xf]
    %v1195 = vld [vmem:[#allocation11 + $0x68] sm:$0xf]
    %v1196 = vld [vmem:[#allocation11 + $0x6c] sm:$0xf]
    %v1197 = vld [vmem:[#allocation11 + $0x70] sm:$0xf]
    %v1198 = vld [vmem:[#allocation11 + $0x74] sm:$0xf]
    %v1199 = vld [vmem:[#allocation11 + $0x78] sm:$0xf]
    %v1200 = vld [vmem:[#allocation11 + $0x7c] sm:$0xf]
    %v1233 = vunpack.c.l.b16 %v1169
    %v1234 = vunpack.c.l.b16 %v1170
    %v1235 = vunpack.c.l.b16 %v1171
    %v1236 = vunpack.c.l.b16 %v1172
    %v1237 = vunpack.c.l.b16 %v1173
    %v1238 = vunpack.c.l.b16 %v1174
    %v1239 = vunpack.c.l.b16 %v1175
    %v1240 = vunpack.c.l.b16 %v1176
    %v1241 = vunpack.c.l.b16 %v1177
    %v1242 = vunpack.c.l.b16 %v1178
    %v1243 = vunpack.c.l.b16 %v1179
    %v1244 = vunpack.c.l.b16 %v1180
    %v1245 = vunpack.c.l.b16 %v1181
    %v1246 = vunpack.c.l.b16 %v1182
    %v1247 = vunpack.c.l.b16 %v1183
    %v1248 = vunpack.c.l.b16 %v1184
    %v1249 = vunpack.c.l.b16 %v1185
    %v1250 = vunpack.c.l.b16 %v1186
    %v1251 = vunpack.c.l.b16 %v1187
    %v1252 = vunpack.c.l.b16 %v1188
    %v1253 = vunpack.c.l.b16 %v1189
    %v1254 = vunpack.c.l.b16 %v1190
    %v1255 = vunpack.c.l.b16 %v1191
    %v1256 = vunpack.c.l.b16 %v1192
    %v1257 = vunpack.c.l.b16 %v1193
    %v1258 = vunpack.c.l.b16 %v1194
    %v1259 = vunpack.c.l.b16 %v1195
    %v1260 = vunpack.c.l.b16 %v1196
    %v1261 = vunpack.c.l.b16 %v1197
    %v1262 = vunpack.c.l.b16 %v1198
    %v1263 = vunpack.c.l.b16 %v1199
    %v1264 = vunpack.c.l.b16 %v1200
    %v1265 = vpack.c.b16 %v1234, %v1233
    %v1266 = vpack.c.b16 %v1236, %v1235
    %v1267 = vpack.c.b16 %v1238, %v1237
    %v1268 = vpack.c.b16 %v1240, %v1239
    %v1269 = vpack.c.b16 %v1242, %v1241
    %v1270 = vpack.c.b16 %v1244, %v1243
    %v1271 = vpack.c.b16 %v1246, %v1245
    %v1272 = vpack.c.b16 %v1248, %v1247
    %v1273 = vpack.c.b16 %v1250, %v1249
    %v1274 = vpack.c.b16 %v1252, %v1251
    %v1275 = vpack.c.b16 %v1254, %v1253
    %v1276 = vpack.c.b16 %v1256, %v1255
    %v1277 = vpack.c.b16 %v1258, %v1257
    %v1278 = vpack.c.b16 %v1260, %v1259
    %v1279 = vpack.c.b16 %v1262, %v1261
    %v1280 = vpack.c.b16 %v1264, %v1263
    %1297 = vmatprep.subr.bf16.mxu0 0
    %1298 = vmatpush1.bf16.msra.mxu0 %v1265
    %1299 = vmatprep.subr.bf16.mxu0 0
    %1300 = vmatpush1.bf16.msra.mxu0 %v1266
    %1301 = vmatprep.subr.bf16.mxu0 0
    %1302 = vmatpush1.bf16.msra.mxu0 %v1267
    %1303 = vmatprep.subr.bf16.mxu0 0
    %1304 = vmatpush1.bf16.msra.mxu0 %v1268
    %1305 = vmatprep.subr.bf16.mxu0 0
    %1306 = vmatpush1.bf16.msra.mxu0 %v1269
    %1307 = vmatprep.subr.bf16.mxu0 0
    %1308 = vmatpush1.bf16.msra.mxu0 %v1270
    %1309 = vmatprep.subr.bf16.mxu0 0
    %1310 = vmatpush1.bf16.msra.mxu0 %v1271
    %1311 = vmatprep.subr.bf16.mxu0 0
    %1312 = vmatpush1.bf16.msra.mxu0 %v1272
    %1313 = vmatprep.subr.bf16.mxu0 0
    %1314 = vmatpush1.bf16.msra.mxu0 %v1273
    %1315 = vmatprep.subr.bf16.mxu0 0
    %1316 = vmatpush1.bf16.msra.mxu0 %v1274
    %1317 = vmatprep.subr.bf16.mxu0 0
    %1318 = vmatpush1.bf16.msra.mxu0 %v1275
    %1319 = vmatprep.subr.bf16.mxu0 0
    %1320 = vmatpush1.bf16.msra.mxu0 %v1276
    %1321 = vmatprep.subr.bf16.mxu0 0
    %1322 = vmatpush1.bf16.msra.mxu0 %v1277
    %1323 = vmatprep.subr.bf16.mxu0 0
    %1324 = vmatpush1.bf16.msra.mxu0 %v1278
    %1325 = vmatprep.subr.bf16.mxu0 0
    %1326 = vmatpush1.bf16.msra.mxu0 %v1279
    %1327 = vmatprep.subr.bf16.mxu0 0
    %1328 = vmatpush1.bf16.msra.mxu0 %v1280
    %1329 = vmatprep.mubr.bf16.mxu0 %v1118
    %1330 = vmatmul.mubr.bf16.gmra.mrb[0].mxu0 %v1117
    %v1331 = vpop.f32.mrb[0].mxu0
    %v1332 = vadd.f32 0.0, %v1331
    %v1333 = vpop.f32.mrb[0].mxu0
    %v1334 = vpop.f32.mrb[0].mxu0
    %v1335 = vadd.f32 0.0, %v1334
    %v1336 = vpop.f32.mrb[0].mxu0
    %1337 = vmatprep.mubr.bf16.mxu0 %v1120
    %1338 = vmatmul.mubr.bf16.gmra.mrb[0].mxu0 %v1119
    %v1339 = vpop.f32.mrb[0].mxu0
    %v1340 = vadd.f32 0.0, %v1339
    %v1341 = vpop.f32.mrb[0].mxu0
    %v1342 = vpop.f32.mrb[0].mxu0
    %v1343 = vadd.f32 0.0, %v1342
    %v1344 = vpop.f32.mrb[0].mxu0
    %1345 = vmatprep.mubr.bf16.mxu0 %v1122
    %1346 = vmatmul.mubr.bf16.gmra.mrb[0].mxu0 %v1121
    %v1347 = vpop.f32.mrb[0].mxu0
    %v1348 = vadd.f32 0.0, %v1347
    %v1349 = vpop.f32.mrb[0].mxu0
    %v1350 = vpop.f32.mrb[0].mxu0
    %v1351 = vadd.f32 0.0, %v1350
    %v1352 = vpop.f32.mrb[0].mxu0
    %1353 = vmatprep.mubr.bf16.mxu0 %v1124
    %1354 = vmatmul.mubr.bf16.gmra.mrb[0].mxu0 %v1123
    %v1355 = vpop.f32.mrb[0].mxu0
    %v1356 = vadd.f32 0.0, %v1355
    %v1357 = vpop.f32.mrb[0].mxu0
    %v1358 = vpop.f32.mrb[0].mxu0
    %v1359 = vadd.f32 0.0, %v1358
    %v1360 = vpop.f32.mrb[0].mxu0
    %1361 = vmatprep.mubr.bf16.mxu0 %v1126
    %1362 = vmatmul.mubr.bf16.gmra.mrb[0].mxu0 %v1125
    %v1363 = vpop.f32.mrb[0].mxu0
    %v1364 = vadd.f32 0.0, %v1363
    %v1365 = vpop.f32.mrb[0].mxu0
    %v1366 = vpop.f32.mrb[0].mxu0
    %v1367 = vadd.f32 0.0, %v1366
    %v1368 = vpop.f32.mrb[0].mxu0
    %1369 = vmatprep.mubr.bf16.mxu0 %v1128
    %1370 = vmatmul.mubr.bf16.gmra.mrb[0].mxu0 %v1127
    %v1371 = vpop.f32.mrb[0].mxu0
    %v1372 = vadd.f32 0.0, %v1371
    %v1373 = vpop.f32.mrb[0].mxu0
    %v1374 = vpop.f32.mrb[0].mxu0
    %v1375 = vadd.f32 0.0, %v1374
    %v1376 = vpop.f32.mrb[0].mxu0
    %1377 = vmatprep.mubr.bf16.mxu0 %v1130
    %1378 = vmatmul.mubr.bf16.gmra.mrb[0].mxu0 %v1129
    %v1379 = vpop.f32.mrb[0].mxu0
    %v1380 = vadd.f32 0.0, %v1379
    %v1381 = vpop.f32.mrb[0].mxu0
    %v1382 = vpop.f32.mrb[0].mxu0
    %v1383 = vadd.f32 0.0, %v1382
    %v1384 = vpop.f32.mrb[0].mxu0
    %1385 = vmatprep.mubr.bf16.mxu0 %v1132
    %1386 = vmatmul.mubr.bf16.gmra.mrb[0].mxu0 %v1131
    %v1387 = vpop.f32.mrb[0].mxu0
    %v1388 = vadd.f32 0.0, %v1387
    %v1389 = vpop.f32.mrb[0].mxu0
    %v1390 = vpop.f32.mrb[0].mxu0
    %v1391 = vadd.f32 0.0, %v1390
    %v1392 = vpop.f32.mrb[0].mxu0
    %1393 = vmatprep.mubr.bf16.mxu0 %v1134
    %1394 = vmatmul.mubr.bf16.gmra.mrb[0].mxu0 %v1133
    %v1395 = vpop.f32.mrb[0].mxu0
    %v1396 = vadd.f32 0.0, %v1395
    %v1397 = vpop.f32.mrb[0].mxu0
    %v1398 = vpop.f32.mrb[0].mxu0
    %v1399 = vadd.f32 0.0, %v1398
    %v1400 = vpop.f32.mrb[0].mxu0
    %1401 = vmatprep.mubr.bf16.mxu0 %v1136
    %1402 = vmatmul.mubr.bf16.gmra.mrb[0].mxu0 %v1135
    %v1403 = vpop.f32.mrb[0].mxu0
    %v1404 = vadd.f32 0.0, %v1403
    %v1405 = vpop.f32.mrb[0].mxu0
    %v1406 = vpop.f32.mrb[0].mxu0
    %v1407 = vadd.f32 0.0, %v1406
    %v1408 = vpop.f32.mrb[0].mxu0
    %1409 = vmatprep.mubr.bf16.mxu0 %v1138
    %1410 = vmatmul.mubr.bf16.gmra.mrb[0].mxu0 %v1137
    %v1411 = vpop.f32.mrb[0].mxu0
    %v1412 = vadd.f32 0.0, %v1411
    %v1413 = vpop.f32.mrb[0].mxu0
    %v1414 = vpop.f32.mrb[0].mxu0
    %v1415 = vadd.f32 0.0, %v1414
    %v1416 = vpop.f32.mrb[0].mxu0
    %1417 = vmatprep.mubr.bf16.mxu0 %v1140
    %1418 = vmatmul.mubr.bf16.gmra.mrb[0].mxu0 %v1139
    %v1419 = vpop.f32.mrb[0].mxu0
    %v1420 = vadd.f32 0.0, %v1419
    %v1421 = vpop.f32.mrb[0].mxu0
    %v1422 = vpop.f32.mrb[0].mxu0
    %v1423 = vadd.f32 0.0, %v1422
    %v1424 = vpop.f32.mrb[0].mxu0
    %1425 = vmatprep.mubr.bf16.mxu0 %v1142
    %1426 = vmatmul.mubr.bf16.gmra.mrb[0].mxu0 %v1141
    %v1427 = vpop.f32.mrb[0].mxu0
    %v1428 = vadd.f32 0.0, %v1427
    %v1429 = vpop.f32.mrb[0].mxu0
    %v1430 = vpop.f32.mrb[0].mxu0
    %v1431 = vadd.f32 0.0, %v1430
    %v1432 = vpop.f32.mrb[0].mxu0
    %1433 = vdwg.mxu0
    %v1434 = vadd.f32 %v1143, %v1332
    %v1435 = vadd.f32 %v1144, %v1335
    %v1436 = vadd.f32 %v1145, %v1340
    %v1437 = vadd.f32 %v1146, %v1343
    %v1438 = vadd.f32 %v1147, %v1348
    %v1439 = vadd.f32 %v1148, %v1351
    %v1440 = vadd.f32 %v1149, %v1356
    %v1441 = vadd.f32 %v1150, %v1359
    %v1442 = vadd.f32 %v1151, %v1364
    %v1443 = vadd.f32 %v1152, %v1367
    %v1444 = vadd.f32 %v1153, %v1372
    %v1445 = vadd.f32 %v1154, %v1375
    %v1446 = vadd.f32 %v1155, %v1380
    %v1447 = vadd.f32 %v1156, %v1383
    %v1448 = vadd.f32 %v1157, %v1388
    %v1449 = vadd.f32 %v1158, %v1391
    %v1450 = vadd.f32 %v1159, %v1396
    %v1451 = vadd.f32 %v1160, %v1399
    %v1452 = vadd.f32 %v1161, %v1404
    %v1453 = vadd.f32 %v1162, %v1407
    %v1454 = vadd.f32 %v1163, %v1412
    %v1455 = vadd.f32 %v1164, %v1415
    %v1456 = vadd.f32 %v1165, %v1420
    %v1457 = vadd.f32 %v1166, %v1423
    %v1458 = vadd.f32 %v1167, %v1428
    %v1459 = vadd.f32 %v1168, %v1431
    %1460 = vst [vmem:[#allocation2] sm:$0xff] %v1434
    %1461 = vst [vmem:[#allocation2 + $0x8] sm:$0xff] %v1435
    %1462 = vst [vmem:[#allocation2 + $0x10] sm:$0xff] %v1436
    %1463 = vst [vmem:[#allocation2 + $0x18] sm:$0xff] %v1437
    %1464 = vst [vmem:[#allocation2 + $0x20] sm:$0xff] %v1438
    %1465 = vst [vmem:[#allocation2 + $0x28] sm:$0xff] %v1439
    %1466 = vst [vmem:[#allocation2 + $0x30] sm:$0xff] %v1440
    %1467 = vst [vmem:[#allocation2 + $0x38] sm:$0xff] %v1441
    %1468 = vst [vmem:[#allocation2 + $0x40] sm:$0xff] %v1442
    %1469 = vst [vmem:[#allocation2 + $0x48] sm:$0xff] %v1443
    %1470 = vst [vmem:[#allocation2 + $0x50] sm:$0xff] %v1444
    %1471 = vst [vmem:[#allocation2 + $0x58] sm:$0xff] %v1445
    %1472 = vst [vmem:[#allocation2 + $0x60] sm:$0xff] %v1446
    %1473 = vst [vmem:[#allocation2 + $0x68] sm:$0xff] %v1447
    %1474 = vst [vmem:[#allocation2 + $0x70] sm:$0xff] %v1448
    %1475 = vst [vmem:[#allocation2 + $0x78] sm:$0xff] %v1449
    %1476 = vst [vmem:[#allocation2 + $0x80] sm:$0xff] %v1450
    %1477 = vst [vmem:[#allocation2 + $0x88] sm:$0xff] %v1451
    %1478 = vst [vmem:[#allocation2 + $0x90] sm:$0xff] %v1452
    %1479 = vst [vmem:[#allocation2 + $0x98] sm:$0xff] %v1453
    %1480 = vst [vmem:[#allocation2 + $0xa0] sm:$0xff] %v1454
    %1481 = vst [vmem:[#allocation2 + $0xa8] sm:$0xff] %v1455
    %1482 = vst [vmem:[#allocation2 + $0xb0] sm:$0xff] %v1456
    %1483 = vst [vmem:[#allocation2 + $0xb8] sm:$0xff] %v1457
    %1484 = vst [vmem:[#allocation2 + $0xc0] sm:$0xff] %v1458
    %1485 = vst [vmem:[#allocation2 + $0xc8] sm:$0xff] %v1459
    %v1486 = vld [vmem:[#allocation5] sm:$0xff]
    %v1487 = vld [vmem:[#allocation5 + $0x8] sm:$0xff]
    %v1488 = vld [vmem:[#allocation5 + $0x10] sm:$0xff]
    %v1489 = vld [vmem:[#allocation5 + $0x18] sm:$0xff]
    %v1490 = vld [vmem:[#allocation5 + $0x20] sm:$0xff]
    %v1491 = vld [vmem:[#allocation5 + $0x28] sm:$0xff]
    %v1492 = vld [vmem:[#allocation5 + $0x30] sm:$0xff]
    %v1493 = vld [vmem:[#allocation5 + $0x38] sm:$0xff]
    %v1494 = vld [vmem:[#allocation5 + $0x40] sm:$0xff]
    %v1495 = vld [vmem:[#allocation5 + $0x48] sm:$0xff]
    %v1496 = vld [vmem:[#allocation5 + $0x50] sm:$0xff]
    %v1497 = vld [vmem:[#allocation5 + $0x58] sm:$0xff]
    %v1498 = vld [vmem:[#allocation5 + $0x60] sm:$0xff]
    %v1499 = vld [vmem:[#allocation5 + $0x68] sm:$0xff]
    %v1500 = vld [vmem:[#allocation5 + $0x70] sm:$0xff]
    %v1501 = vld [vmem:[#allocation5 + $0x78] sm:$0xff]
    %v1502 = vld [vmem:[#allocation5 + $0x80] sm:$0xff]
    %v1503 = vld [vmem:[#allocation5 + $0x88] sm:$0xff]
    %v1504 = vld [vmem:[#allocation5 + $0x90] sm:$0xff]
    %v1505 = vld [vmem:[#allocation5 + $0x98] sm:$0xff]
    %v1506 = vld [vmem:[#allocation5 + $0xa0] sm:$0xff]
    %v1507 = vld [vmem:[#allocation5 + $0xa8] sm:$0xff]
    %v1508 = vld [vmem:[#allocation5 + $0xb0] sm:$0xff]
    %v1509 = vld [vmem:[#allocation5 + $0xb8] sm:$0xff]
    %v1510 = vld [vmem:[#allocation5 + $0xc0] sm:$0xff]
    %v1511 = vld [vmem:[#allocation5 + $0xc8] sm:$0xff]
    %v1513 = vlaneseq
    %v1514 = vshrl.u32 %v1513, 7
    %v1515 = vsub.s32 0, %v1514
    %v1516 = vrot.slane %v332, %v1515
    %v1517 = vlaneseq
    %v1518 = vshrl.u32 %v1517, 7
    %v1519 = vsub.s32 1, %v1518
    %v1520 = vrot.slane %v332, %v1519
    %v1523 = vmul.f32 %v1002, %v1516
    %v1524 = vmul.f32 %v1003, %v1520
    %v1525 = vmul.f32 %v1004, %v1516
    %v1526 = vmul.f32 %v1005, %v1520
    %v1527 = vmul.f32 %v1006, %v1516
    %v1528 = vmul.f32 %v1007, %v1520
    %v1529 = vmul.f32 %v1008, %v1516
    %v1530 = vmul.f32 %v1009, %v1520
    %v1531 = vmul.f32 %v1010, %v1516
    %v1532 = vmul.f32 %v1011, %v1520
    %v1533 = vmul.f32 %v1012, %v1516
    %v1534 = vmul.f32 %v1013, %v1520
    %v1535 = vmul.f32 %v1014, %v1516
    %v1536 = vmul.f32 %v1015, %v1520
    %v1537 = vmul.f32 %v1016, %v1516
    %v1538 = vmul.f32 %v1017, %v1520
    %v1539 = vmul.f32 %v1018, %v1516
    %v1540 = vmul.f32 %v1019, %v1520
    %v1541 = vmul.f32 %v1020, %v1516
    %v1542 = vmul.f32 %v1021, %v1520
    %v1543 = vmul.f32 %v1022, %v1516
    %v1544 = vmul.f32 %v1023, %v1520
    %v1545 = vmul.f32 %v1024, %v1516
    %v1546 = vmul.f32 %v1025, %v1520
    %v1547 = vmul.f32 %v1026, %v1516
    %v1548 = vmul.f32 %v1027, %v1520
    %v1549 = vmul.f32 %v1028, %v1516
    %v1550 = vmul.f32 %v1029, %v1520
    %v1551 = vmul.f32 %v1030, %v1516
    %v1552 = vmul.f32 %v1031, %v1520
    %v1553 = vmul.f32 %v1032, %v1516
    %v1554 = vmul.f32 %v1033, %v1520
    %v1555 = vmul.f32 %v1034, %v1516
    %v1556 = vmul.f32 %v1035, %v1520
    %v1557 = vmul.f32 %v1036, %v1516
    %v1558 = vmul.f32 %v1037, %v1520
    %v1559 = vmul.f32 %v1038, %v1516
    %v1560 = vmul.f32 %v1039, %v1520
    %v1561 = vmul.f32 %v1040, %v1516
    %v1562 = vmul.f32 %v1041, %v1520
    %v1563 = vmul.f32 %v1042, %v1516
    %v1564 = vmul.f32 %v1043, %v1520
    %v1565 = vmul.f32 %v1044, %v1516
    %v1566 = vmul.f32 %v1045, %v1520
    %v1567 = vmul.f32 %v1046, %v1516
    %v1568 = vmul.f32 %v1047, %v1520
    %v1569 = vmul.f32 %v1048, %v1516
    %v1570 = vmul.f32 %v1049, %v1520
    %v1571 = vmul.f32 %v1050, %v1516
    %v1572 = vmul.f32 %v1051, %v1520
    %v1573 = vmul.f32 %v1052, %v1516
    %v1574 = vmul.f32 %v1053, %v1520
    %v1575 = vadd.f32 %v1523, %v1524
    %1576 = vadd.xlane.f32.xlu0 %v1575
    %v1577 = vpop.xlane.xlu0 %1576
    %v1578 = vadd.f32 %v1525, %v1526
    %1579 = vadd.xlane.f32.xlu0 %v1578
    %v1580 = vpop.xlane.xlu0 %1579
    %v1581 = vadd.f32 %v1527, %v1528
    %1582 = vadd.xlane.f32.xlu0 %v1581
    %v1583 = vpop.xlane.xlu0 %1582
    %v1584 = vadd.f32 %v1529, %v1530
    %1585 = vadd.xlane.f32.xlu0 %v1584
    %v1586 = vpop.xlane.xlu0 %1585
    %v1587 = vadd.f32 %v1531, %v1532
    %1588 = vadd.xlane.f32.xlu0 %v1587
    %v1589 = vpop.xlane.xlu0 %1588
    %v1590 = vadd.f32 %v1533, %v1534
    %1591 = vadd.xlane.f32.xlu0 %v1590
    %v1592 = vpop.xlane.xlu0 %1591
    %v1593 = vadd.f32 %v1535, %v1536
    %1594 = vadd.xlane.f32.xlu0 %v1593
    %v1595 = vpop.xlane.xlu0 %1594
    %v1596 = vadd.f32 %v1537, %v1538
    %1597 = vadd.xlane.f32.xlu0 %v1596
    %v1598 = vpop.xlane.xlu0 %1597
    %v1599 = vadd.f32 %v1539, %v1540
    %1600 = vadd.xlane.f32.xlu0 %v1599
    %v1601 = vpop.xlane.xlu0 %1600
    %v1602 = vadd.f32 %v1541, %v1542
    %1603 = vadd.xlane.f32.xlu0 %v1602
    %v1604 = vpop.xlane.xlu0 %1603
    %v1605 = vadd.f32 %v1543, %v1544
    %1606 = vadd.xlane.f32.xlu0 %v1605
    %v1607 = vpop.xlane.xlu0 %1606
    %v1608 = vadd.f32 %v1545, %v1546
    %1609 = vadd.xlane.f32.xlu0 %v1608
    %v1610 = vpop.xlane.xlu0 %1609
    %v1611 = vadd.f32 %v1547, %v1548
    %1612 = vadd.xlane.f32.xlu0 %v1611
    %v1613 = vpop.xlane.xlu0 %1612
    %v1614 = vadd.f32 %v1549, %v1550
    %1615 = vadd.xlane.f32.xlu0 %v1614
    %v1616 = vpop.xlane.xlu0 %1615
    %v1617 = vadd.f32 %v1551, %v1552
    %1618 = vadd.xlane.f32.xlu0 %v1617
    %v1619 = vpop.xlane.xlu0 %1618
    %v1620 = vadd.f32 %v1553, %v1554
    %1621 = vadd.xlane.f32.xlu0 %v1620
    %v1622 = vpop.xlane.xlu0 %1621
    %v1623 = vadd.f32 %v1555, %v1556
    %1624 = vadd.xlane.f32.xlu0 %v1623
    %v1625 = vpop.xlane.xlu0 %1624
    %v1626 = vadd.f32 %v1557, %v1558
    %1627 = vadd.xlane.f32.xlu0 %v1626
    %v1628 = vpop.xlane.xlu0 %1627
    %v1629 = vadd.f32 %v1559, %v1560
    %1630 = vadd.xlane.f32.xlu0 %v1629
    %v1631 = vpop.xlane.xlu0 %1630
    %v1632 = vadd.f32 %v1561, %v1562
    %1633 = vadd.xlane.f32.xlu0 %v1632
    %v1634 = vpop.xlane.xlu0 %1633
    %v1635 = vadd.f32 %v1563, %v1564
    %1636 = vadd.xlane.f32.xlu0 %v1635
    %v1637 = vpop.xlane.xlu0 %1636
    %v1638 = vadd.f32 %v1565, %v1566
    %1639 = vadd.xlane.f32.xlu0 %v1638
    %v1640 = vpop.xlane.xlu0 %1639
    %v1641 = vadd.f32 %v1567, %v1568
    %1642 = vadd.xlane.f32.xlu0 %v1641
    %v1643 = vpop.xlane.xlu0 %1642
    %v1644 = vadd.f32 %v1569, %v1570
    %1645 = vadd.xlane.f32.xlu0 %v1644
    %v1646 = vpop.xlane.xlu0 %1645
    %v1647 = vadd.f32 %v1571, %v1572
    %1648 = vadd.xlane.f32.xlu0 %v1647
    %v1649 = vpop.xlane.xlu0 %1648
    %v1650 = vadd.f32 %v1573, %v1574
    %1651 = vadd.xlane.f32.xlu0 %v1650
    %v1652 = vpop.xlane.xlu0 %1651
    %v1653 = vadd.f32 %v1486, %v1577
    %v1654 = vadd.f32 %v1487, %v1580
    %v1655 = vadd.f32 %v1488, %v1583
    %v1656 = vadd.f32 %v1489, %v1586
    %v1657 = vadd.f32 %v1490, %v1589
    %v1658 = vadd.f32 %v1491, %v1592
    %v1659 = vadd.f32 %v1492, %v1595
    %v1660 = vadd.f32 %v1493, %v1598
    %v1661 = vadd.f32 %v1494, %v1601
    %v1662 = vadd.f32 %v1495, %v1604
    %v1663 = vadd.f32 %v1496, %v1607
    %v1664 = vadd.f32 %v1497, %v1610
    %v1665 = vadd.f32 %v1498, %v1613
    %v1666 = vadd.f32 %v1499, %v1616
    %v1667 = vadd.f32 %v1500, %v1619
    %v1668 = vadd.f32 %v1501, %v1622
    %v1669 = vadd.f32 %v1502, %v1625
    %v1670 = vadd.f32 %v1503, %v1628
    %v1671 = vadd.f32 %v1504, %v1631
    %v1672 = vadd.f32 %v1505, %v1634
    %v1673 = vadd.f32 %v1506, %v1637
    %v1674 = vadd.f32 %v1507, %v1640
    %v1675 = vadd.f32 %v1508, %v1643
    %v1676 = vadd.f32 %v1509, %v1646
    %v1677 = vadd.f32 %v1510, %v1649
    %v1678 = vadd.f32 %v1511, %v1652
    %vm1679 = vcmask 7168
    %1680 = vst.msk [vmem:[#allocation5] sm:$0xff] %vm1679, %v1653
    %1681 = vst.msk [vmem:[#allocation5 + $0x8] sm:$0xff] %vm1679, %v1654
    %1682 = vst.msk [vmem:[#allocation5 + $0x10] sm:$0xff] %vm1679, %v1655
    %1683 = vst.msk [vmem:[#allocation5 + $0x18] sm:$0xff] %vm1679, %v1656
    %1684 = vst.msk [vmem:[#allocation5 + $0x20] sm:$0xff] %vm1679, %v1657
    %1685 = vst.msk [vmem:[#allocation5 + $0x28] sm:$0xff] %vm1679, %v1658
    %1686 = vst.msk [vmem:[#allocation5 + $0x30] sm:$0xff] %vm1679, %v1659
    %1687 = vst.msk [vmem:[#allocation5 + $0x38] sm:$0xff] %vm1679, %v1660
    %1688 = vst.msk [vmem:[#allocation5 + $0x40] sm:$0xff] %vm1679, %v1661
    %1689 = vst.msk [vmem:[#allocation5 + $0x48] sm:$0xff] %vm1679, %v1662
    %1690 = vst.msk [vmem:[#allocation5 + $0x50] sm:$0xff] %vm1679, %v1663
    %1691 = vst.msk [vmem:[#allocation5 + $0x58] sm:$0xff] %vm1679, %v1664
    %1692 = vst.msk [vmem:[#allocation5 + $0x60] sm:$0xff] %vm1679, %v1665
    %1693 = vst.msk [vmem:[#allocation5 + $0x68] sm:$0xff] %vm1679, %v1666
    %1694 = vst.msk [vmem:[#allocation5 + $0x70] sm:$0xff] %vm1679, %v1667
    %1695 = vst.msk [vmem:[#allocation5 + $0x78] sm:$0xff] %vm1679, %v1668
    %1696 = vst.msk [vmem:[#allocation5 + $0x80] sm:$0xff] %vm1679, %v1669
    %1697 = vst.msk [vmem:[#allocation5 + $0x88] sm:$0xff] %vm1679, %v1670
    %1698 = vst.msk [vmem:[#allocation5 + $0x90] sm:$0xff] %vm1679, %v1671
    %1699 = vst.msk [vmem:[#allocation5 + $0x98] sm:$0xff] %vm1679, %v1672
    %1700 = vst.msk [vmem:[#allocation5 + $0xa0] sm:$0xff] %vm1679, %v1673
    %1701 = vst.msk [vmem:[#allocation5 + $0xa8] sm:$0xff] %vm1679, %v1674
    %1702 = vst.msk [vmem:[#allocation5 + $0xb0] sm:$0xff] %vm1679, %v1675
    %1703 = vst.msk [vmem:[#allocation5 + $0xb8] sm:$0xff] %vm1679, %v1676
    %1704 = vst.msk [vmem:[#allocation5 + $0xc0] sm:$0xff] %vm1679, %v1677
    %1705 = vst.msk [vmem:[#allocation5 + $0xc8] sm:$0xff] %vm1679, %v1678
    // Predicated region
    $region42: #{tpu_custom_call.1} parent=1 // pred_check
      %p1706 = pneg %p75
    $region43: #{tpu_custom_call.1} parent=1 // pred_check_branch
      %1708 = sbr.rel (%p1706) target = $region45
    $region44: #{tpu_custom_call.1} parent=1 // pred_region
      %v1709 = vld [vmem:[%s3 + $0x2] sm:$0x1]
      %v1710 = vld [vmem:[%s3 + $0x3] sm:$0x1]
      %v1711 = vld [vmem:[%s3 + $0x4] sm:$0x1]
      %v1712 = vld [vmem:[#allocation2] sm:$0xff]
      %v1713 = vld [vmem:[#allocation2 + $0x8] sm:$0xff]
      %v1714 = vld [vmem:[#allocation2 + $0x10] sm:$0xff]
      %v1715 = vld [vmem:[#allocation2 + $0x18] sm:$0xff]
      %v1716 = vld [vmem:[#allocation2 + $0x20] sm:$0xff]
      %v1717 = vld [vmem:[#allocation2 + $0x28] sm:$0xff]
      %v1718 = vld [vmem:[#allocation2 + $0x30] sm:$0xff]
      %v1719 = vld [vmem:[#allocation2 + $0x38] sm:$0xff]
      %v1720 = vld [vmem:[#allocation2 + $0x40] sm:$0xff]
      %v1721 = vld [vmem:[#allocation2 + $0x48] sm:$0xff]
      %v1722 = vld [vmem:[#allocation2 + $0x50] sm:$0xff]
      %v1723 = vld [vmem:[#allocation2 + $0x58] sm:$0xff]
      %v1724 = vld [vmem:[#allocation2 + $0x60] sm:$0xff]
      %v1725 = vld [vmem:[#allocation2 + $0x68] sm:$0xff]
      %v1726 = vld [vmem:[#allocation2 + $0x70] sm:$0xff]
      %v1727 = vld [vmem:[#allocation2 + $0x78] sm:$0xff]
      %v1728 = vld [vmem:[#allocation2 + $0x80] sm:$0xff]
      %v1729 = vld [vmem:[#allocation2 + $0x88] sm:$0xff]
      %v1730 = vld [vmem:[#allocation2 + $0x90] sm:$0xff]
      %v1731 = vld [vmem:[#allocation2 + $0x98] sm:$0xff]
      %v1732 = vld [vmem:[#allocation2 + $0xa0] sm:$0xff]
      %v1733 = vld [vmem:[#allocation2 + $0xa8] sm:$0xff]
      %v1734 = vld [vmem:[#allocation2 + $0xb0] sm:$0xff]
      %v1735 = vld [vmem:[#allocation2 + $0xb8] sm:$0xff]
      %v1736 = vld [vmem:[#allocation2 + $0xc0] sm:$0xff]
      %v1737 = vld [vmem:[#allocation2 + $0xc8] sm:$0xff]
      %v1738 = vlaneseq
      %v1739 = vshrl.u32 %v1738, 7
      %v1740 = vsub.s32 0, %v1739
      %v1741 = vrot.slane %v1709, %v1740
      %v1742 = vmul.f32 %v1712, %v1741
      %v1743 = vmul.f32 %v1713, %v1741
      %v1744 = vmul.f32 %v1714, %v1741
      %v1745 = vmul.f32 %v1715, %v1741
      %v1746 = vmul.f32 %v1716, %v1741
      %v1747 = vmul.f32 %v1717, %v1741
      %v1748 = vmul.f32 %v1718, %v1741
      %v1749 = vmul.f32 %v1719, %v1741
      %v1750 = vmul.f32 %v1720, %v1741
      %v1751 = vmul.f32 %v1721, %v1741
      %v1752 = vmul.f32 %v1722, %v1741
      %v1753 = vmul.f32 %v1723, %v1741
      %v1754 = vmul.f32 %v1724, %v1741
      %v1755 = vmul.f32 %v1725, %v1741
      %v1756 = vmul.f32 %v1726, %v1741
      %v1757 = vmul.f32 %v1727, %v1741
      %v1758 = vmul.f32 %v1728, %v1741
      %v1759 = vmul.f32 %v1729, %v1741
      %v1760 = vmul.f32 %v1730, %v1741
      %v1761 = vmul.f32 %v1731, %v1741
      %v1762 = vmul.f32 %v1732, %v1741
      %v1763 = vmul.f32 %v1733, %v1741
      %v1764 = vmul.f32 %v1734, %v1741
      %v1765 = vmul.f32 %v1735, %v1741
      %v1766 = vmul.f32 %v1736, %v1741
      %v1767 = vmul.f32 %v1737, %v1741
      %v1768 = vld [vmem:[#allocation5] sm:$0xff]
      %v1769 = vld [vmem:[#allocation5 + $0x8] sm:$0xff]
      %v1770 = vld [vmem:[#allocation5 + $0x10] sm:$0xff]
      %v1771 = vld [vmem:[#allocation5 + $0x18] sm:$0xff]
      %v1772 = vld [vmem:[#allocation5 + $0x20] sm:$0xff]
      %v1773 = vld [vmem:[#allocation5 + $0x28] sm:$0xff]
      %v1774 = vld [vmem:[#allocation5 + $0x30] sm:$0xff]
      %v1775 = vld [vmem:[#allocation5 + $0x38] sm:$0xff]
      %v1776 = vld [vmem:[#allocation5 + $0x40] sm:$0xff]
      %v1777 = vld [vmem:[#allocation5 + $0x48] sm:$0xff]
      %v1778 = vld [vmem:[#allocation5 + $0x50] sm:$0xff]
      %v1779 = vld [vmem:[#allocation5 + $0x58] sm:$0xff]
      %v1780 = vld [vmem:[#allocation5 + $0x60] sm:$0xff]
      %v1781 = vld [vmem:[#allocation5 + $0x68] sm:$0xff]
      %v1782 = vld [vmem:[#allocation5 + $0x70] sm:$0xff]
      %v1783 = vld [vmem:[#allocation5 + $0x78] sm:$0xff]
      %v1784 = vld [vmem:[#allocation5 + $0x80] sm:$0xff]
      %v1785 = vld [vmem:[#allocation5 + $0x88] sm:$0xff]
      %v1786 = vld [vmem:[#allocation5 + $0x90] sm:$0xff]
      %v1787 = vld [vmem:[#allocation5 + $0x98] sm:$0xff]
      %v1788 = vld [vmem:[#allocation5 + $0xa0] sm:$0xff]
      %v1789 = vld [vmem:[#allocation5 + $0xa8] sm:$0xff]
      %v1790 = vld [vmem:[#allocation5 + $0xb0] sm:$0xff]
      %v1791 = vld [vmem:[#allocation5 + $0xb8] sm:$0xff]
      %v1792 = vld [vmem:[#allocation5 + $0xc0] sm:$0xff]
      %v1793 = vld [vmem:[#allocation5 + $0xc8] sm:$0xff]
      %1795 = vset.pattern.permute.xlu0 0
      %1796 = vperm.xlu0 %1795, %v1768
      %v1797 = vpop.permute.xlu0 %1796
      %1800 = vset.pattern.permute.xlu0 0
      %1801 = vperm.xlu0 %1800, %v1769
      %v1802 = vpop.permute.xlu0 %1801
      %1805 = vset.pattern.permute.xlu0 0
      %1806 = vperm.xlu0 %1805, %v1770
      %v1807 = vpop.permute.xlu0 %1806
      %1810 = vset.pattern.permute.xlu0 0
      %1811 = vperm.xlu0 %1810, %v1771
      %v1812 = vpop.permute.xlu0 %1811
      %1815 = vset.pattern.permute.xlu0 0
      %1816 = vperm.xlu0 %1815, %v1772
      %v1817 = vpop.permute.xlu0 %1816
      %1820 = vset.pattern.permute.xlu0 0
      %1821 = vperm.xlu0 %1820, %v1773
      %v1822 = vpop.permute.xlu0 %1821
      %1825 = vset.pattern.permute.xlu0 0
      %1826 = vperm.xlu0 %1825, %v1774
      %v1827 = vpop.permute.xlu0 %1826
      %1830 = vset.pattern.permute.xlu0 0
      %1831 = vperm.xlu0 %1830, %v1775
      %v1832 = vpop.permute.xlu0 %1831
      %1835 = vset.pattern.permute.xlu0 0
      %1836 = vperm.xlu0 %1835, %v1776
      %v1837 = vpop.permute.xlu0 %1836
      %1840 = vset.pattern.permute.xlu0 0
      %1841 = vperm.xlu0 %1840, %v1777
      %v1842 = vpop.permute.xlu0 %1841
      %1845 = vset.pattern.permute.xlu0 0
      %1846 = vperm.xlu0 %1845, %v1778
      %v1847 = vpop.permute.xlu0 %1846
      %1850 = vset.pattern.permute.xlu0 0
      %1851 = vperm.xlu0 %1850, %v1779
      %v1852 = vpop.permute.xlu0 %1851
      %1855 = vset.pattern.permute.xlu0 0
      %1856 = vperm.xlu0 %1855, %v1780
      %v1857 = vpop.permute.xlu0 %1856
      %1860 = vset.pattern.permute.xlu0 0
      %1861 = vperm.xlu0 %1860, %v1781
      %v1862 = vpop.permute.xlu0 %1861
      %1865 = vset.pattern.permute.xlu0 0
      %1866 = vperm.xlu0 %1865, %v1782
      %v1867 = vpop.permute.xlu0 %1866
      %1870 = vset.pattern.permute.xlu0 0
      %1871 = vperm.xlu0 %1870, %v1783
      %v1872 = vpop.permute.xlu0 %1871
      %1875 = vset.pattern.permute.xlu0 0
      %1876 = vperm.xlu0 %1875, %v1784
      %v1877 = vpop.permute.xlu0 %1876
      %1880 = vset.pattern.permute.xlu0 0
      %1881 = vperm.xlu0 %1880, %v1785
      %v1882 = vpop.permute.xlu0 %1881
      %1885 = vset.pattern.permute.xlu0 0
      %1886 = vperm.xlu0 %1885, %v1786
      %v1887 = vpop.permute.xlu0 %1886
      %1890 = vset.pattern.permute.xlu0 0
      %1891 = vperm.xlu0 %1890, %v1787
      %v1892 = vpop.permute.xlu0 %1891
      %1895 = vset.pattern.permute.xlu0 0
      %1896 = vperm.xlu0 %1895, %v1788
      %v1897 = vpop.permute.xlu0 %1896
      %1900 = vset.pattern.permute.xlu0 0
      %1901 = vperm.xlu0 %1900, %v1789
      %v1902 = vpop.permute.xlu0 %1901
      %1905 = vset.pattern.permute.xlu0 0
      %1906 = vperm.xlu0 %1905, %v1790
      %v1907 = vpop.permute.xlu0 %1906
      %1910 = vset.pattern.permute.xlu0 0
      %1911 = vperm.xlu0 %1910, %v1791
      %v1912 = vpop.permute.xlu0 %1911
      %1915 = vset.pattern.permute.xlu0 0
      %1916 = vperm.xlu0 %1915, %v1792
      %v1917 = vpop.permute.xlu0 %1916
      %1920 = vset.pattern.permute.xlu0 0
      %1921 = vperm.xlu0 %1920, %v1793
      %v1922 = vpop.permute.xlu0 %1921
      %v1924 = vlaneseq
      %v1925 = vshrl.u32 %v1924, 7
      %v1926 = vsub.s32 0, %v1925
      %v1927 = vrot.slane %v1710, %v1926
      %v1928 = vmul.f32 %v1797, %v1927
      %v1929 = vmul.f32 %v1802, %v1927
      %v1930 = vmul.f32 %v1807, %v1927
      %v1931 = vmul.f32 %v1812, %v1927
      %v1932 = vmul.f32 %v1817, %v1927
      %v1933 = vmul.f32 %v1822, %v1927
      %v1934 = vmul.f32 %v1827, %v1927
      %v1935 = vmul.f32 %v1832, %v1927
      %v1936 = vmul.f32 %v1837, %v1927
      %v1937 = vmul.f32 %v1842, %v1927
      %v1938 = vmul.f32 %v1847, %v1927
      %v1939 = vmul.f32 %v1852, %v1927
      %v1940 = vmul.f32 %v1857, %v1927
      %v1941 = vmul.f32 %v1862, %v1927
      %v1942 = vmul.f32 %v1867, %v1927
      %v1943 = vmul.f32 %v1872, %v1927
      %v1944 = vmul.f32 %v1877, %v1927
      %v1945 = vmul.f32 %v1882, %v1927
      %v1946 = vmul.f32 %v1887, %v1927
      %v1947 = vmul.f32 %v1892, %v1927
      %v1948 = vmul.f32 %v1897, %v1927
      %v1949 = vmul.f32 %v1902, %v1927
      %v1950 = vmul.f32 %v1907, %v1927
      %v1951 = vmul.f32 %v1912, %v1927
      %v1952 = vmul.f32 %v1917, %v1927
      %v1953 = vmul.f32 %v1922, %v1927
      %v1954 = vadd.f32 %v1742, %v1928
      %v1955 = vadd.f32 %v1743, %v1929
      %v1956 = vadd.f32 %v1744, %v1930
      %v1957 = vadd.f32 %v1745, %v1931
      %v1958 = vadd.f32 %v1746, %v1932
      %v1959 = vadd.f32 %v1747, %v1933
      %v1960 = vadd.f32 %v1748, %v1934
      %v1961 = vadd.f32 %v1749, %v1935
      %v1962 = vadd.f32 %v1750, %v1936
      %v1963 = vadd.f32 %v1751, %v1937
      %v1964 = vadd.f32 %v1752, %v1938
      %v1965 = vadd.f32 %v1753, %v1939
      %v1966 = vadd.f32 %v1754, %v1940
      %v1967 = vadd.f32 %v1755, %v1941
      %v1968 = vadd.f32 %v1756, %v1942
      %v1969 = vadd.f32 %v1757, %v1943
      %v1970 = vadd.f32 %v1758, %v1944
      %v1971 = vadd.f32 %v1759, %v1945
      %v1972 = vadd.f32 %v1760, %v1946
      %v1973 = vadd.f32 %v1761, %v1947
      %v1974 = vadd.f32 %v1762, %v1948
      %v1975 = vadd.f32 %v1763, %v1949
      %v1976 = vadd.f32 %v1764, %v1950
      %v1977 = vadd.f32 %v1765, %v1951
      %v1978 = vadd.f32 %v1766, %v1952
      %v1979 = vadd.f32 %v1767, %v1953
      %v1980 = vlaneseq
      %v1981 = vshrl.u32 %v1980, 7
      %v1982 = vsub.s32 0, %v1981
      %v1983 = vrot.slane %v1711, %v1982
      %v1984 = vadd.f32 %v1954, %v1983
      %v1985 = vadd.f32 %v1955, %v1983
      %v1986 = vadd.f32 %v1956, %v1983
      %v1987 = vadd.f32 %v1957, %v1983
      %v1988 = vadd.f32 %v1958, %v1983
      %v1989 = vadd.f32 %v1959, %v1983
      %v1990 = vadd.f32 %v1960, %v1983
      %v1991 = vadd.f32 %v1961, %v1983
      %v1992 = vadd.f32 %v1962, %v1983
      %v1993 = vadd.f32 %v1963, %v1983
      %v1994 = vadd.f32 %v1964, %v1983
      %v1995 = vadd.f32 %v1965, %v1983
      %v1996 = vadd.f32 %v1966, %v1983
      %v1997 = vadd.f32 %v1967, %v1983
      %v1998 = vadd.f32 %v1968, %v1983
      %v1999 = vadd.f32 %v1969, %v1983
      %v2000 = vadd.f32 %v1970, %v1983
      %v2001 = vadd.f32 %v1971, %v1983
      %v2002 = vadd.f32 %v1972, %v1983
      %v2003 = vadd.f32 %v1973, %v1983
      %v2004 = vadd.f32 %v1974, %v1983
      %v2005 = vadd.f32 %v1975, %v1983
      %v2006 = vadd.f32 %v1976, %v1983
      %v2007 = vadd.f32 %v1977, %v1983
      %v2008 = vadd.f32 %v1978, %v1983
      %v2009 = vadd.f32 %v1979, %v1983
      %2010 = vst [vmem:[#allocation14] sm:$0xff] %v1984
      %2011 = vst [vmem:[#allocation14 + $0x8] sm:$0xff] %v1985
      %2012 = vst [vmem:[#allocation14 + $0x10] sm:$0xff] %v1986
      %2013 = vst [vmem:[#allocation14 + $0x18] sm:$0xff] %v1987
      %2014 = vst [vmem:[#allocation14 + $0x20] sm:$0xff] %v1988
      %2015 = vst [vmem:[#allocation14 + $0x28] sm:$0xff] %v1989
      %2016 = vst [vmem:[#allocation14 + $0x30] sm:$0xff] %v1990
      %2017 = vst [vmem:[#allocation14 + $0x38] sm:$0xff] %v1991
      %2018 = vst [vmem:[#allocation14 + $0x40] sm:$0xff] %v1992
      %2019 = vst [vmem:[#allocation14 + $0x48] sm:$0xff] %v1993
      %2020 = vst [vmem:[#allocation14 + $0x50] sm:$0xff] %v1994
      %2021 = vst [vmem:[#allocation14 + $0x58] sm:$0xff] %v1995
      %2022 = vst [vmem:[#allocation14 + $0x60] sm:$0xff] %v1996
      %2023 = vst [vmem:[#allocation14 + $0x68] sm:$0xff] %v1997
      %2024 = vst [vmem:[#allocation14 + $0x70] sm:$0xff] %v1998
      %2025 = vst [vmem:[#allocation14 + $0x78] sm:$0xff] %v1999
      %2026 = vst [vmem:[#allocation14 + $0x80] sm:$0xff] %v2000
      %2027 = vst [vmem:[#allocation14 + $0x88] sm:$0xff] %v2001
      %2028 = vst [vmem:[#allocation14 + $0x90] sm:$0xff] %v2002
      %2029 = vst [vmem:[#allocation14 + $0x98] sm:$0xff] %v2003
      %2030 = vst [vmem:[#allocation14 + $0xa0] sm:$0xff] %v2004
      %2031 = vst [vmem:[#allocation14 + $0xa8] sm:$0xff] %v2005
      %2032 = vst [vmem:[#allocation14 + $0xb0] sm:$0xff] %v2006
      %2033 = vst [vmem:[#allocation14 + $0xb8] sm:$0xff] %v2007
      %2034 = vst [vmem:[#allocation14 + $0xc0] sm:$0xff] %v2008
      %2035 = vst [vmem:[#allocation14 + $0xc8] sm:$0xff] %v2009
    $region45: #{tpu_custom_call.1} parent=1 // pred_fallthru
      _
    // Predicated region
    $region46: #{tpu_custom_call.1} parent=1 // pred_check
      _
    $region47: #{tpu_custom_call.1} parent=1 // pred_check_branch
      %2037 = sbr.rel (0) target = $region49
    $region48: #{tpu_custom_call.1} parent=1 // pred_region
      %s2039 = ssub.s32 3328, 3328
      %2040 = vsyncadd [#allocation8], %s2039
      %s2041 = sshll.u32 [#allocation14], 4
      %s2042 = int_to_ptr.vmem [resolvable:$true] %s2041
      %2047 = dma.vmem_to_hbm [thread:$0]  %s2042, 3328, %s5, [#allocation8], 128, 128, 8
    $region49: #{tpu_custom_call.1} parent=1 // pred_fallthru
      _
    // Predicated region
    $region50: #{tpu_custom_call.1} parent=1 // pred_check
      _
    $region51: #{tpu_custom_call.1} parent=1 // pred_check_branch
      %2049 = sbr.rel (0) target = $region53
    $region52: #{tpu_custom_call.1} parent=1 // pred_region
      %2050 = dma.done [#allocation8], 3328
    $region53: #{tpu_custom_call.1} parent=1 // pred_fallthru
      _
    %2051 = vsyncpa [#allocation7], 1
    %2052 = vsyncpa [#allocation10], 1
    %2053 = vsyncpa [#allocation13], 1
    %2054 = vsyncpa [#allocation8], 1

</llo_original>
